<compile_context>
chip_gen: v7x
topology: tpu7x:2x2x1
jax: 0.10.0
libtpu: 0.0.40
codegen_flags: <defaults>
</compile_context>

<pallas_src>
import functools

import jax
import jax.numpy as jnp
from jax import lax
from jax.experimental import pallas as pl
from jax.experimental.pallas import tpu as pltpu


def _round_up(x, m):
    return ((x + m - 1) // m) * m


def _pad2(a, rows, cols):
    return jnp.pad(a, ((0, rows - a.shape[0]), (0, cols - a.shape[1])))


def _pad1(a, n):
    return jnp.pad(a.astype(jnp.float32), (0, n - a.shape[0]))


# ------------------------------- kernel --------------------------------------

def _paired_smile_kernel(feat_dim, clf_out,
                         x_ref, w1_ref, bn1_ref, w2_ref, bn2_ref,
                         wh_ref, bh_ref, out_ref, acc_ref):
    eps = jnp.float32(1e-5)
    big_neg = jnp.float32(-1e30)
    k = pl.program_id(1)
    nk = pl.num_programs(1)

    # ---- layer-1 contraction, tiled over the input dim (K) -------------------
    @pl.when(k == 0)
    def _():
        acc_ref[...] = jnp.zeros_like(acc_ref)

    # x is bf16, w1 is bf16; MXU accumulates in f32.
    acc_ref[...] += jnp.dot(x_ref[...], w1_ref[...],
                            preferred_element_type=jnp.float32)

    # ---- epilogue on the last K step -----------------------------------------
    @pl.when(k == nk - 1)
    def _():
        # BN1 (batch statistics, biased var) folded into scale/shift, then ReLU.
        h = acc_ref[...]
        bn1 = bn1_ref[...]                       # row 0 = gamma, row 1 = beta
        mu = jnp.mean(h, axis=0, keepdims=True)
        var = jnp.mean((h - mu) * (h - mu), axis=0, keepdims=True)
        scale = bn1[0:1, :] * lax.rsqrt(var + eps)
        shift = bn1[1:2, :] - mu * scale
        h = jnp.maximum(h * scale + shift, 0.0)

        # layer 2: Linear (bf16 weights, bias cancelled by BN) -> BN -> ReLU
        h2 = jnp.dot(h.astype(jnp.bfloat16), w2_ref[...],
                     preferred_element_type=jnp.float32)
        bn2 = bn2_ref[...]
        mu2 = jnp.mean(h2, axis=0, keepdims=True)
        var2 = jnp.mean((h2 - mu2) * (h2 - mu2), axis=0, keepdims=True)
        scale2 = bn2[0:1, :] * lax.rsqrt(var2 + eps)
        shift2 = bn2[1:2, :] - mu2 * scale2
        h2 = jnp.maximum(h2 * scale2 + shift2, 0.0)

        # fused heads: [feature | clf] in one bf16 matmul, lane-dense output
        z = (jnp.dot(h2.astype(jnp.bfloat16), wh_ref[...],
                     preferred_element_type=jnp.float32) + bh_ref[...])

        lane = lax.broadcasted_iota(jnp.int32, z.shape, 1)
        is_clf = (lane >= feat_dim) & (lane < feat_dim + clf_out)

        # softmax restricted to the clf lanes; other lanes contribute exp(-1e30)=0
        masked = jnp.where(is_clf, z, big_neg)
        m = jnp.max(masked, axis=1, keepdims=True)
        e = jnp.exp(masked - m)
        probs = e * pl.reciprocal(jnp.sum(e, axis=1, keepdims=True), approx=True)

        # lanes [0, feat) = feature output, clf lanes = softmax probs, rest ~ 0
        out_ref[...] = jnp.where(lane < feat_dim, z, probs)


# ------------------------------ wrapper ---------------------------------------

def _choose_tk(in_pad, tk_max):
    """Largest multiple of 128 <= tk_max that divides in_pad."""
    cap = max(128, min(in_pad, (tk_max // 128) * 128))
    for tk in range(cap, 0, -128):
        if in_pad % tk == 0:
            return tk
    return 128


def _paired_call(x_st, params, feat_dim, clf_out, tk):
    _, B, in_pad = x_st.shape
    h1_pad = params["w1"].shape[2]
    h2_pad = params["w2"].shape[2]
    head_pad = params["wh"].shape[1]
    nk = in_pad // tk

    kernel = functools.partial(_paired_smile_kernel, feat_dim, clf_out)

    return pl.pallas_call(
        kernel,
        out_shape=jax.ShapeDtypeStruct((2, B, head_pad), jnp.float32),
        grid=(2, nk),
        in_specs=[
            pl.BlockSpec((None, B, tk), lambda i, k: (i, 0, k)),            # x (bf16)
            pl.BlockSpec((None, tk, h1_pad), lambda i, k: (i, k, 0)),       # w1 (bf16)
            pl.BlockSpec((None, 2, h1_pad), lambda i, k: (i, 0, 0)),        # bn1 [gamma;beta]
            pl.BlockSpec((None, h1_pad, h2_pad), lambda i, k: (i, 0, 0)),   # w2 (bf16)
            pl.BlockSpec((None, 2, h2_pad), lambda i, k: (i, 0, 0)),        # bn2 [gamma;beta]
            pl.BlockSpec((h2_pad, head_pad), lambda i, k: (0, 0)),          # wh (bf16, shared)
            pl.BlockSpec((1, head_pad), lambda i, k: (0, 0)),               # bh (shared)
        ],
        out_specs=pl.BlockSpec((None, B, head_pad), lambda i, k: (i, 0, 0)),
        scratch_shapes=[pltpu.VMEM((B, h1_pad), jnp.float32)],
        compiler_params=pltpu.CompilerParams(
            dimension_semantics=("parallel", "arbitrary")),
    )(x_st, params["w1"], params["bn1"], params["w2"], params["bn2"],
      params["wh"], params["bh"])


def paired_smile_forward(x_a, x_b, params, feat_dim, clf_out, tk_max=2048):
    in_pad = params["w1"].shape[1]
    xa = jnp.pad(x_a.astype(jnp.bfloat16), ((0, 0), (0, in_pad - x_a.shape[1])))
    xb = jnp.pad(x_b.astype(jnp.bfloat16), ((0, 0), (0, in_pad - x_b.shape[1])))
    x_st = jnp.stack([xa, xb], axis=0)                    # (2, B, in_pad) bf16

    tk = _choose_tk(in_pad, tk_max)
    out = _paired_call(x_st, params, feat_dim, clf_out, tk)   # (2, B, head_pad)

    f_a = out[0, :, :feat_dim]
    y_a = out[0, :, feat_dim:feat_dim + clf_out]
    f_b = out[1, :, :feat_dim]
    y_b = out[1, :, feat_dim:feat_dim + clf_out]
    return f_a, y_a, f_b, y_b


# --------------------------- parameter construction ---------------------------

def _linear_init(key, fan_in, fan_out):
    """torch.nn.Linear default init (bound = 1/sqrt(fan_in)); weight stored (in, out)."""
    kw, kb = jax.random.split(key)
    bound = 1.0 / jnp.sqrt(jnp.float32(fan_in))
    w = jax.random.uniform(kw, (fan_in, fan_out), jnp.float32, -bound, bound)
    b = jax.random.uniform(kb, (fan_out,), jnp.float32, -bound, bound)
    return w, b


def make_params(key, input_dim_a, input_dim_b, hidden1, hidden2,
                feat_dim, clf_out):
    in_pad = _round_up(max(input_dim_a, input_dim_b), 128)
    h1_pad = _round_up(hidden1, 128)
    h2_pad = _round_up(hidden2, 128)
    head_pad = _round_up(feat_dim + clf_out, 128)

    keys = jax.random.split(key, 6)

    def encoder(k0, k1, in_dim):
        # Linear biases are dropped: they cancel exactly under train-mode BN.
        w1, _ = _linear_init(k0, in_dim, hidden1)
        w2, _ = _linear_init(k1, hidden1, hidden2)
        w1 = _pad2(w1, in_pad, h1_pad).astype(jnp.bfloat16)
        w2 = _pad2(w2, h1_pad, h2_pad).astype(jnp.bfloat16)
        # padded gamma lanes = 0 -> padded columns stay exactly zero after BN+ReLU
        bn1 = jnp.stack([_pad1(jnp.ones(hidden1), h1_pad),
                         jnp.zeros(h1_pad, jnp.float32)], axis=0)   # [gamma; beta]
        bn2 = jnp.stack([_pad1(jnp.ones(hidden2), h2_pad),
                         jnp.zeros(h2_pad, jnp.float32)], axis=0)
        return w1, bn1, w2, bn2

    enc_a = encoder(keys[0], keys[1], input_dim_a)
    enc_b = encoder(keys[2], keys[3], input_dim_b)

    wc, bc = _linear_init(keys[4], hidden2, clf_out)
    wf, bf = _linear_init(keys[5], hidden2, feat_dim)
    wh = _pad2(jnp.concatenate([wf, wc], axis=1), h2_pad, head_pad).astype(jnp.bfloat16)
    bh = _pad2(jnp.concatenate([bf, bc]).reshape(1, -1), 1, head_pad)

    params = {
        name: jnp.stack([pa, pb], axis=0)
        for name, pa, pb in zip(("w1", "bn1", "w2", "bn2"), enc_a, enc_b)
    }
    params["wh"] = wh
    params["bh"] = bh
    return params


# ------------------------------ pure-JAX reference ----------------------------

def _reference_forward(x_a, x_b, params, feat_dim, clf_out):
    """Mirrors the kernel math (same bf16 cast points) with plain JAX ops."""
    in_pad = params["w1"].shape[1]
    eps = 1e-5
    outs = []
    for br, x in ((0, x_a), (1, x_b)):
        xp = jnp.pad(x.astype(jnp.bfloat16), ((0, 0), (0, in_pad - x.shape[1])))
        h = jnp.dot(xp, params["w1"][br], preferred_element_type=jnp.float32)
        mu = h.mean(0, keepdims=True)
        var = ((h - mu) ** 2).mean(0, keepdims=True)
        scale = params["bn1"][br, 0:1, :] * lax.rsqrt(var + eps)
        shift = params["bn1"][br, 1:2, :] - mu * scale
        h = jnp.maximum(h * scale + shift, 0.0)

        h2 = jnp.dot(h.astype(jnp.bfloat16), params["w2"][br],
                     preferred_element_type=jnp.float32)
        mu2 = h2.mean(0, keepdims=True)
        var2 = ((h2 - mu2) ** 2).mean(0, keepdims=True)
        scale2 = params["bn2"][br, 0:1, :] * lax.rsqrt(var2 + eps)
        shift2 = params["bn2"][br, 1:2, :] - mu2 * scale2
        h2 = jnp.maximum(h2 * scale2 + shift2, 0.0)

        z = (jnp.dot(h2.astype(jnp.bfloat16), params["wh"],
                     preferred_element_type=jnp.float32) + params["bh"])
        f = z[:, :feat_dim]
        y = jax.nn.softmax(z[:, feat_dim:feat_dim + clf_out], axis=1)
        outs.append((f, y))
    return outs[0][0], outs[0][1], outs[1][0], outs[1][1]


# ---------------------------------- main ---------------------------------------

if __name__ == "__main__":
    # Small-but-consistent shapes: batch=8, input_dim_a=256, input_dim_b=192.
    # Hidden sizes (1000, 128), feature dim (32), clf_out (10) follow the module.
    B = 8
    INPUT_DIM_A = 256
    INPUT_DIM_B = 192
    HIDDEN1 = 1000
    HIDDEN2 = 128
    FEAT_DIM = 32
    CLF_OUT = 10

    key = jax.random.PRNGKey(0)
    k_params, k_xa, k_xb = jax.random.split(key, 3)

    params = make_params(k_params, INPUT_DIM_A, INPUT_DIM_B,
                         HIDDEN1, HIDDEN2, FEAT_DIM, CLF_OUT)

    x_a = jax.random.normal(k_xa, (B, INPUT_DIM_A), jnp.float32)
    x_b = jax.random.normal(k_xb, (B, INPUT_DIM_B), jnp.float32)

    # default path: whole contraction in one K tile (nk = 1)
    fwd = jax.jit(functools.partial(paired_smile_forward,
                                    feat_dim=FEAT_DIM, clf_out=CLF_OUT))
    f_a, y_a, f_b, y_b = fwd(x_a, x_b, params)
    jax.block_until_ready((f_a, y_a, f_b, y_b))

    # K-tiled path (tk=128 -> 2 reduction steps) to exercise the accumulator
    fwd_tiled = jax.jit(functools.partial(paired_smile_forward,
                                          feat_dim=FEAT_DIM, clf_out=CLF_OUT,
                                          tk_max=128))
    tf_a, ty_a, tf_b, ty_b = fwd_tiled(x_a, x_b, params)
    jax.block_until_ready((tf_a, ty_a, tf_b, ty_b))

    # shape checks
    assert f_a.shape == (B, FEAT_DIM) and f_b.shape == (B, FEAT_DIM)
    assert y_a.shape == (B, CLF_OUT) and y_b.shape == (B, CLF_OUT)

    # softmax rows sum to ~1 (EUP approx reciprocal in the kernel)
    assert jnp.allclose(jnp.sum(y_a, axis=1), 1.0, atol=5e-3)
    assert jnp.allclose(jnp.sum(y_b, axis=1), 1.0, atol=5e-3)

    # value check against a pure-JAX reference with identical precision choices
    rf_a, ry_a, rf_b, ry_b = _reference_forward(x_a, x_b, params,
                                                FEAT_DIM, CLF_OUT)
    for got, ref in ((f_a, rf_a), (y_a, ry_a), (f_b, rf_b), (y_b, ry_b)):
        assert jnp.allclose(got, ref, rtol=2e-2, atol=2e-2)
    for got, ref in ((tf_a, rf_a), (ty_a, ry_a), (tf_b, rf_b), (ty_b, ry_b)):
        assert jnp.allclose(got, ref, rtol=2e-2, atol=2e-2)

    # both grid layouts agree with each other
    for a, b in ((f_a, tf_a), (y_a, ty_a), (f_b, tf_b), (y_b, ty_b)):
        assert jnp.allclose(a, b, rtol=5e-3, atol=5e-3)

    print("KERNEL_OK")
</pallas_src>

<mosaic_0001>
module attributes {stable_mosaic.version = 11 : i64} {
  func.func @_paired_smile_kernel(%arg0: i32, %arg1: i32, %arg2: memref<1x8x256xbf16, #tpu.memory_space<vmem>>, %arg3: memref<1x256x1024xbf16, #tpu.memory_space<vmem>>, %arg4: memref<1x2x1024xf32, #tpu.memory_space<vmem>>, %arg5: memref<1x1024x128xbf16, #tpu.memory_space<vmem>>, %arg6: memref<1x2x128xf32, #tpu.memory_space<vmem>>, %arg7: memref<128x128xbf16, #tpu.memory_space<vmem>>, %arg8: memref<1x128xf32, #tpu.memory_space<vmem>>, %arg9: memref<1x8x128xf32, #tpu.memory_space<vmem>>, %arg10: memref<8x1024xf32, #tpu.memory_space<vmem>>) attributes {dimension_semantics = [#tpu.dimension_semantics<parallel>, #tpu.dimension_semantics<arbitrary>], iteration_bounds = array<i64: 2, 1>, scalar_prefetch = 0 : i64, scratch_operands = 1 : i64, tpu.core_type = #tpu.core_type<tc>, window_params = [{transform_indices = @transform_0, window_bounds = array<i64: 1, 8, 256>}, {transform_indices = @transform_1, window_bounds = array<i64: 1, 256, 1024>}, {transform_indices = @transform_2, window_bounds = array<i64: 1, 2, 1024>}, {transform_indices = @transform_3, window_bounds = array<i64: 1, 1024, 128>}, {transform_indices = @transform_4, window_bounds = array<i64: 1, 2, 128>}, {pipeline_mode = #tpu.pipeline_mode<synchronous>, transform_indices = @transform_5, window_bounds = array<i64: 128, 128>}, {pipeline_mode = #tpu.pipeline_mode<synchronous>, transform_indices = @transform_6, window_bounds = array<i64: 1, 128>}, {transform_indices = @transform_7, window_bounds = array<i64: 1, 8, 128>}]} {
    %c0_i32 = arith.constant 0 : i32
    %0 = arith.cmpi eq, %arg1, %c0_i32 : i32
    %1 = arith.extui %0 : i1 to i32
    %c0_i32_0 = arith.constant 0 : i32
    %2 = arith.cmpi ne, %1, %c0_i32_0 : i32
    scf.if %2 {
      %cst_14 = arith.constant 0.000000e+00 : f32
      %14 = vector.broadcast %cst_14 : f32 to vector<8x1024xf32>
      %c0_15 = arith.constant 0 : index
      %c0_16 = arith.constant 0 : index
      %15 = vector.load %arg10[%c0_15, %c0_16] : memref<8x1024xf32, #tpu.memory_space<vmem>>, vector<8x1024xf32>
      tpu.vector_store %arg10[%c0_15, %c0_16], %14 {strides = array<i32>} : memref<8x1024xf32, #tpu.memory_space<vmem>>, vector<8x1024xf32>,
    } else {
    }
    %c0 = arith.constant 0 : index
    %c0_1 = arith.constant 0 : index
    %3 = vector.load %arg10[%c0, %c0_1] : memref<8x1024xf32, #tpu.memory_space<vmem>>, vector<8x1024xf32>
    %c0_2 = arith.constant 0 : index
    %c0_3 = arith.constant 0 : index
    %c0_4 = arith.constant 0 : index
    %4 = vector.load %arg2[%c0_2, %c0_3, %c0_4] : memref<1x8x256xbf16, #tpu.memory_space<vmem>>, vector<1x8x256xbf16>
    %5 = vector.shape_cast %4 : vector<1x8x256xbf16> to vector<8x256xbf16>
    %c0_5 = arith.constant 0 : index
    %c0_6 = arith.constant 0 : index
    %c0_7 = arith.constant 0 : index
    %6 = vector.load %arg3[%c0_5, %c0_6, %c0_7] : memref<1x256x1024xbf16, #tpu.memory_space<vmem>>, vector<1x256x1024xbf16>
    %7 = vector.shape_cast %6 : vector<1x256x1024xbf16> to vector<256x1024xbf16>
    %cst = arith.constant dense<0.000000e+00> : vector<8x1024xf32>
    %8 = tpu.matmul %5, %7, %cst {dimension_numbers = #tpu.dot_dimension_numbers<[1], [0], [0], [1], [0, 0, 1, 1], [], []>} : vector<8x256xbf16>, vector<256x1024xbf16>, vector<8x1024xf32> -> vector<8x1024xf32>
    %9 = arith.addf %3, %8 : vector<8x1024xf32>
    %c0_8 = arith.constant 0 : index
    %c0_9 = arith.constant 0 : index
    %10 = vector.load %arg10[%c0_8, %c0_9] : memref<8x1024xf32, #tpu.memory_space<vmem>>, vector<8x1024xf32>
    tpu.vector_store %arg10[%c0_8, %c0_9], %9 {strides = array<i32>} : memref<8x1024xf32, #tpu.memory_space<vmem>>, vector<8x1024xf32>,
    %c0_i32_10 = arith.constant 0 : i32
    %11 = arith.cmpi eq, %arg1, %c0_i32_10 : i32
    %12 = arith.extui %11 : i1 to i32
    %cst_11 = arith.constant 9.99999974E-6 : f32
    %cst_12 = arith.constant -1.000000e+30 : f32
    %c0_i32_13 = arith.constant 0 : i32
    %13 = arith.cmpi ne, %12, %c0_i32_13 : i32
    scf.if %13 {
      %c0_14 = arith.constant 0 : index
      %c0_15 = arith.constant 0 : index
      %14 = vector.load %arg10[%c0_14, %c0_15] : memref<8x1024xf32, #tpu.memory_space<vmem>>, vector<8x1024xf32>
      %c0_16 = arith.constant 0 : index
      %c0_17 = arith.constant 0 : index
      %c0_18 = arith.constant 0 : index
      %15 = vector.load %arg4[%c0_16, %c0_17, %c0_18] : memref<1x2x1024xf32, #tpu.memory_space<vmem>>, vector<1x2x1024xf32>
      %16 = vector.shape_cast %15 : vector<1x2x1024xf32> to vector<2x1024xf32>
      %cst_19 = arith.constant dense<0.000000e+00> : vector<1024xf32>
      %17 = vector.multi_reduction <add>, %14, %cst_19 [0] : vector<8x1024xf32> to vector<1024xf32>
      %18 = vector.shape_cast %17 : vector<1024xf32> to vector<1x1024xf32>
      %cst_20 = arith.constant 8.000000e+00 : f32
      %19 = vector.broadcast %cst_20 : f32 to vector<1x1024xf32>
      %20 = arith.divf %18, %19 : vector<1x1024xf32>
      %21 = vector.broadcast %20 : vector<1x1024xf32> to vector<8x1024xf32>
      %22 = arith.subf %14, %21 : vector<8x1024xf32>
      %23 = vector.broadcast %20 : vector<1x1024xf32> to vector<8x1024xf32>
      %24 = arith.subf %14, %23 : vector<8x1024xf32>
      %25 = arith.mulf %22, %24 : vector<8x1024xf32>
      %cst_21 = arith.constant dense<0.000000e+00> : vector<1024xf32>
      %26 = vector.multi_reduction <add>, %25, %cst_21 [0] : vector<8x1024xf32> to vector<1024xf32>
      %27 = vector.shape_cast %26 : vector<1024xf32> to vector<1x1024xf32>
      %cst_22 = arith.constant 8.000000e+00 : f32
      %28 = vector.broadcast %cst_22 : f32 to vector<1x1024xf32>
      %29 = arith.divf %27, %28 : vector<1x1024xf32>
      %30 = vector.extract_strided_slice %16 {offsets = [0, 0], sizes = [1, 1024], strides = [1, 1]} : vector<2x1024xf32> to vector<1x1024xf32>
      %31 = vector.broadcast %cst_11 : f32 to vector<1x1024xf32>
      %32 = arith.addf %29, %31 : vector<1x1024xf32>
      %33 = math.rsqrt %32 : vector<1x1024xf32>
      %34 = arith.mulf %30, %33 : vector<1x1024xf32>
      %35 = vector.extract_strided_slice %16 {offsets = [1, 0], sizes = [1, 1024], strides = [1, 1]} : vector<2x1024xf32> to vector<1x1024xf32>
      %36 = arith.mulf %20, %34 : vector<1x1024xf32>
      %37 = arith.subf %35, %36 : vector<1x1024xf32>
      %38 = vector.broadcast %34 : vector<1x1024xf32> to vector<8x1024xf32>
      %39 = arith.mulf %14, %38 : vector<8x1024xf32>
      %40 = vector.broadcast %37 : vector<1x1024xf32> to vector<8x1024xf32>
      %41 = arith.addf %39, %40 : vector<8x1024xf32>
      %cst_23 = arith.constant 0.000000e+00 : f32
      %42 = vector.broadcast %cst_23 : f32 to vector<8x1024xf32>
      %43 = arith.maximumf %41, %42 : vector<8x1024xf32>
      %44 = arith.truncf %43 : vector<8x1024xf32> to vector<8x1024xbf16>
      %c0_24 = arith.constant 0 : index
      %c0_25 = arith.constant 0 : index
      %c0_26 = arith.constant 0 : index
      %45 = vector.load %arg5[%c0_24, %c0_25, %c0_26] : memref<1x1024x128xbf16, #tpu.memory_space<vmem>>, vector<1x1024x128xbf16>
      %46 = vector.shape_cast %45 : vector<1x1024x128xbf16> to vector<1024x128xbf16>
      %cst_27 = arith.constant dense<0.000000e+00> : vector<8x128xf32>
      %47 = tpu.matmul %44, %46, %cst_27 {dimension_numbers = #tpu.dot_dimension_numbers<[1], [0], [0], [1], [0, 0, 1, 1], [], []>} : vector<8x1024xbf16>, vector<1024x128xbf16>, vector<8x128xf32> -> vector<8x128xf32>
      %c0_28 = arith.constant 0 : index
      %c0_29 = arith.constant 0 : index
      %c0_30 = arith.constant 0 : index
      %48 = vector.load %arg6[%c0_28, %c0_29, %c0_30] : memref<1x2x128xf32, #tpu.memory_space<vmem>>, vector<1x2x128xf32>
      %49 = vector.shape_cast %48 : vector<1x2x128xf32> to vector<2x128xf32>
      %cst_31 = arith.constant dense<0.000000e+00> : vector<128xf32>
      %50 = vector.multi_reduction <add>, %47, %cst_31 [0] : vector<8x128xf32> to vector<128xf32>
      %51 = vector.shape_cast %50 : vector<128xf32> to vector<1x128xf32>
      %cst_32 = arith.constant 8.000000e+00 : f32
      %52 = vector.broadcast %cst_32 : f32 to vector<1x128xf32>
      %53 = arith.divf %51, %52 : vector<1x128xf32>
      %54 = vector.broadcast %53 : vector<1x128xf32> to vector<8x128xf32>
      %55 = arith.subf %47, %54 : vector<8x128xf32>
      %56 = vector.broadcast %53 : vector<1x128xf32> to vector<8x128xf32>
      %57 = arith.subf %47, %56 : vector<8x128xf32>
      %58 = arith.mulf %55, %57 : vector<8x128xf32>
      %cst_33 = arith.constant dense<0.000000e+00> : vector<128xf32>
      %59 = vector.multi_reduction <add>, %58, %cst_33 [0] : vector<8x128xf32> to vector<128xf32>
      %60 = vector.shape_cast %59 : vector<128xf32> to vector<1x128xf32>
      %cst_34 = arith.constant 8.000000e+00 : f32
      %61 = vector.broadcast %cst_34 : f32 to vector<1x128xf32>
      %62 = arith.divf %60, %61 : vector<1x128xf32>
      %63 = vector.extract_strided_slice %49 {offsets = [0, 0], sizes = [1, 128], strides = [1, 1]} : vector<2x128xf32> to vector<1x128xf32>
      %64 = vector.broadcast %cst_11 : f32 to vector<1x128xf32>
      %65 = arith.addf %62, %64 : vector<1x128xf32>
      %66 = math.rsqrt %65 : vector<1x128xf32>
      %67 = arith.mulf %63, %66 : vector<1x128xf32>
      %68 = vector.extract_strided_slice %49 {offsets = [1, 0], sizes = [1, 128], strides = [1, 1]} : vector<2x128xf32> to vector<1x128xf32>
      %69 = arith.mulf %53, %67 : vector<1x128xf32>
      %70 = arith.subf %68, %69 : vector<1x128xf32>
      %71 = vector.broadcast %67 : vector<1x128xf32> to vector<8x128xf32>
      %72 = arith.mulf %47, %71 : vector<8x128xf32>
      %73 = vector.broadcast %70 : vector<1x128xf32> to vector<8x128xf32>
      %74 = arith.addf %72, %73 : vector<8x128xf32>
      %cst_35 = arith.constant 0.000000e+00 : f32
      %75 = vector.broadcast %cst_35 : f32 to vector<8x128xf32>
      %76 = arith.maximumf %74, %75 : vector<8x128xf32>
      %77 = arith.truncf %76 : vector<8x128xf32> to vector<8x128xbf16>
      %c0_36 = arith.constant 0 : index
      %c0_37 = arith.constant 0 : index
      %78 = vector.load %arg7[%c0_36, %c0_37] : memref<128x128xbf16, #tpu.memory_space<vmem>>, vector<128x128xbf16>
      %cst_38 = arith.constant dense<0.000000e+00> : vector<8x128xf32>
      %79 = tpu.matmul %77, %78, %cst_38 {dimension_numbers = #tpu.dot_dimension_numbers<[1], [0], [0], [1], [0, 0, 1, 1], [], []>} : vector<8x128xbf16>, vector<128x128xbf16>, vector<8x128xf32> -> vector<8x128xf32>
      %c0_39 = arith.constant 0 : index
      %c0_40 = arith.constant 0 : index
      %80 = vector.load %arg8[%c0_39, %c0_40] : memref<1x128xf32, #tpu.memory_space<vmem>>, vector<1x128xf32>
      %81 = vector.broadcast %80 : vector<1x128xf32> to vector<8x128xf32>
      %82 = arith.addf %79, %81 : vector<8x128xf32>
      %83 = tpu.iota {dimensions = array<i32: 1>} : vector<8x128xi32>
      %c32_i32 = arith.constant 32 : i32
      %84 = vector.broadcast %c32_i32 : i32 to vector<8x128xi32>
      %85 = arith.cmpi sge, %83, %84 : vector<8x128xi32>
      %c42_i32 = arith.constant 42 : i32
      %86 = vector.broadcast %c42_i32 : i32 to vector<8x128xi32>
      %87 = arith.cmpi slt, %83, %86 : vector<8x128xi32>
      %88 = arith.andi %85, %87 : vector<8x128xi1>
      %89 = vector.broadcast %cst_12 : f32 to vector<8x128xf32>
      %90 = arith.select %88, %82, %89 : vector<8x128xi1>, vector<8x128xf32>
      %cst_41 = arith.constant dense<0xFF800000> : vector<8xf32>
      %91 = vector.multi_reduction <maximumf>, %90, %cst_41 [1] : vector<8x128xf32> to vector<8xf32>
      %92 = vector.shape_cast %91 : vector<8xf32> to vector<8x1xf32>
      %93 = vector.broadcast %92 : vector<8x1xf32> to vector<8x128xf32>
      %94 = arith.subf %90, %93 : vector<8x128xf32>
      %95 = math.exp %94 : vector<8x128xf32>
      %cst_42 = arith.constant dense<0.000000e+00> : vector<8xf32>
      %96 = vector.multi_reduction <add>, %95, %cst_42 [1] : vector<8x128xf32> to vector<8xf32>
      %97 = vector.shape_cast %96 : vector<8xf32> to vector<8x1xf32>
      %98 = tpu.reciprocal %97 {approx = true} : vector<8x1xf32> -> vector<8x1xf32>
      %99 = vector.broadcast %98 : vector<8x1xf32> to vector<8x128xf32>
      %100 = arith.mulf %95, %99 : vector<8x128xf32>
      %c32_i32_43 = arith.constant 32 : i32
      %101 = vector.broadcast %c32_i32_43 : i32 to vector<8x128xi32>
      %102 = arith.cmpi slt, %83, %101 : vector<8x128xi32>
      %103 = arith.select %102, %82, %100 : vector<8x128xi1>, vector<8x128xf32>
      %c0_44 = arith.constant 0 : index
      %c0_45 = arith.constant 0 : index
      %c0_46 = arith.constant 0 : index
      %104 = vector.load %arg9[%c0_44, %c0_45, %c0_46] : memref<1x8x128xf32, #tpu.memory_space<vmem>>, vector<1x8x128xf32>
      %105 = vector.shape_cast %104 : vector<1x8x128xf32> to vector<8x128xf32>
      %106 = vector.shape_cast %103 : vector<8x128xf32> to vector<1x8x128xf32>
      tpu.vector_store %arg9[%c0_44, %c0_45, %c0_46], %106 {strides = array<i32>} : memref<1x8x128xf32, #tpu.memory_space<vmem>>, vector<1x8x128xf32>,
    } else {
    }
    return
  }
  func.func @transform_0(%arg0: i32, %arg1: i32) -> (i32, i32, i32) {
    %c0_i32 = arith.constant 0 : i32
    %c0_i32_0 = arith.constant 0 : i32
    return %arg0, %c0_i32, %arg1 : i32, i32, i32
  }
  func.func @transform_1(%arg0: i32, %arg1: i32) -> (i32, i32, i32) {
    %c0_i32 = arith.constant 0 : i32
    %c0_i32_0 = arith.constant 0 : i32
    return %arg0, %arg1, %c0_i32 : i32, i32, i32
  }
  func.func @transform_2(%arg0: i32, %arg1: i32) -> (i32, i32, i32) {
    %c0_i32 = arith.constant 0 : i32
    %c0_i32_0 = arith.constant 0 : i32
    %c0_i32_1 = arith.constant 0 : i32
    return %arg0, %c0_i32, %c0_i32_0 : i32, i32, i32
  }
  func.func @transform_3(%arg0: i32, %arg1: i32) -> (i32, i32, i32) {
    %c0_i32 = arith.constant 0 : i32
    %c0_i32_0 = arith.constant 0 : i32
    %c0_i32_1 = arith.constant 0 : i32
    return %arg0, %c0_i32, %c0_i32_0 : i32, i32, i32
  }
  func.func @transform_4(%arg0: i32, %arg1: i32) -> (i32, i32, i32) {
    %c0_i32 = arith.constant 0 : i32
    %c0_i32_0 = arith.constant 0 : i32
    %c0_i32_1 = arith.constant 0 : i32
    return %arg0, %c0_i32, %c0_i32_0 : i32, i32, i32
  }
  func.func @transform_5(%arg0: i32, %arg1: i32) -> (i32, i32) {
    %c0_i32 = arith.constant 0 : i32
    %c0_i32_0 = arith.constant 0 : i32
    %c0_i32_1 = arith.constant 0 : i32
    return %c0_i32, %c0_i32_0 : i32, i32
  }
  func.func @transform_6(%arg0: i32, %arg1: i32) -> (i32, i32) {
    %c0_i32 = arith.constant 0 : i32
    %c0_i32_0 = arith.constant 0 : i32
    %c0_i32_1 = arith.constant 0 : i32
    return %c0_i32, %c0_i32_0 : i32, i32
  }
  func.func @transform_7(%arg0: i32, %arg1: i32) -> (i32, i32, i32) {
    %c0_i32 = arith.constant 0 : i32
    %c0_i32_0 = arith.constant 0 : i32
    %c0_i32_1 = arith.constant 0 : i32
    return %arg0, %c0_i32, %c0_i32_0 : i32, i32, i32
  }
}

</mosaic_0001>

<llo_original>
// kernel: paired_smile_forward.1
$region0: #{paired_smile_forward.1}
  #allocation0 [shape = 'u32[]', space=smem, size = 0x4, offset = 0x4, fixed_abs, tag = 'smem constant byte address 0x4 - core index']
  #allocation1 [shape = 'u32[144,128]{1,0:T(1,128)}', space=vmem, size = 0x12000, scoped, tag = 'internal scratch']
  #allocation2 [shape = 'f32[8,1024]{1,0:T(8,128)}', space=vmem, size = 0x8000, scoped, tag = 'scratch operand']
  %s0 = inlined_call_operand.vmem [shape: bf16[2,8,256], index: 0, kind: input, shape index: {}]
  %s1 = inlined_call_operand.hbm [shape: bf16[2,256,1024], index: 1, kind: input, shape index: {}]
  %s2 = inlined_call_operand.vmem [shape: f32[2,2,1024], index: 2, kind: input, shape index: {}]
  %s3 = inlined_call_operand.hbm [shape: bf16[2,1024,128], index: 3, kind: input, shape index: {}]
  %s4 = inlined_call_operand.vmem [shape: f32[2,2,128], index: 4, kind: input, shape index: {}]
  %s5 = inlined_call_operand.vmem [shape: bf16[128,128], index: 5, kind: input, shape index: {}]
  %s6 = inlined_call_operand.vmem [shape: f32[1,128], index: 6, kind: input, shape index: {}]
  %s7 = inlined_call_operand.vmem [shape: f32[2,8,128], index: 7, kind: output, shape index: {}]
  %s8 = sld [smem:[#allocation0]]
  $region77: #{paired_smile_forward.1} parent=0
    _
  %s10 = ssub.s32 1, %s8
  %s11 = scalar_select 0, %s10, %s8
  $region1: #{paired_smile_forward.1} parent=0
    #allocation3 [shape = 'u8[1048576]{0}', space=vmem, size = 0x100000, scoped, tag = 'input window, operand 1']
    #allocation4 [shape = 's32[2]{0}', space=sflag, size = 0x8, scoped, tag = 'scoped memory for paired_smile_forward.1']
    #allocation5 [shape = 'u8[524288]{0}', space=vmem, size = 0x80000, scoped, tag = 'input window, operand 3']
    #allocation6 [shape = 's32[2]{0}', space=sflag, size = 0x8, scoped, tag = 'scoped memory for paired_smile_forward.1']
    %12 = vsyncpa [#allocation4], 0
    %s13 = scalar_lea.sflag [#allocation4], 1
    %14 = vsyncpa %s13, 0
    %15 = vsyncpa [#allocation6], 0
    %s16 = scalar_lea.sflag [#allocation6], 1
    %17 = vsyncpa %s16, 0
    loop: start=0, step=1, limit=4
    $region2: #{paired_smile_forward.1} parent=1 // loop_pre_header
      _
    $region3: #{paired_smile_forward.1} parent=1 // loop_header
      %s19 = sphi 0, %s23
      %p20 = scmp.ge.s32.totalorder %s19, 4
      %s26 = sphi 0, %s38
      %s27 = sphi 0, %s34
      %s28 = sphi 0, %s26
      %s29 = sphi 0, %s27
      %s30 = sphi 0, %s28
      %s31 = sphi 0, %s29
      %s43 = sphi 0, %s45
      %s46 = sphi 0, %s43
      %s47 = sphi 0, %s46
      %s63 = sphi 0, %s47
      %s71 = sphi 0, %s73
      %s74 = sphi 0, %s71
      %s75 = sphi 0, %s74
      %s91 = sphi 0, %s75
      %s97 = sphi 0, %s99
      %s100 = sphi 0, %s97
      %s101 = sphi 0, %s100
      %s117 = sphi 0, %s101
      %s123 = sphi 0, %s125
      %s126 = sphi 0, %s123
      %s127 = sphi 0, %s126
      %s143 = sphi 0, %s127
      %s149 = sphi 0, %s151
      %s152 = sphi 0, %s149
      %s153 = sphi 0, %s152
      %s169 = sphi 0, %s153
      %s173 = sphi 0, %s173
      %s175 = sphi 0, %s173
      %s176 = sphi 0, %s175
      %s190 = sphi 0, %s176
      %s194 = sphi 0, %s194
      %s196 = sphi 0, %s194
      %s197 = sphi 0, %s196
      %s211 = sphi 0, %s197
      %s217 = sphi 0, %s219
      %s220 = sphi 0, %s217
      %s221 = sphi 0, %s220
      %s237 = sphi 0, %s221
    $region4: #{paired_smile_forward.1} parent=1 // loop_header_branch
      %22 = sbr.rel (%p20) target = $region8
    $region5: #{paired_smile_forward.1} parent=1 // loop_body
      %s24 = ssub.s32 %s19, 1
      %s25 = ssub.s32 %s19, 2
      %s32 = sadd.s32 1, %s27
      %p33 = scmp.ge.s32.totalorder %s32, 1
      %s34 = scalar_select %p33, 0, %s32
      %s35 = sadd.s32 1, %s26
      %s36 = scalar_select %p33, %s35, %s26
      %p37 = scmp.ge.s32.totalorder %s36, 2
      %s38 = scalar_select %p37, 0, %s36
      %s39 = ssub.s32 %s26, %s38
      %s40 = ssub.s32 %s27, %s34
      %s41 = sor.u32 %s39, %s40
      %p42 = scmp.eq.s32.totalorder %s41, 0
      %s44 = sadd.s32 %s43, 1
      %s45 = scalar_select %p42, %s43, %s44
      %p48 = pneg %p42
      %p49 = scmp.eq.s32.totalorder %s19, 1
      %p50 = por %p48, %p49
      %p51 = scmp.ne.s32.totalorder %s43, %s46
      %p52 = scmp.eq.s32.totalorder %s19, 0
      %p53 = por %p51, %p52
      %p54 = scmp.ne.s32.totalorder %s43, %s46
      %p55 = scmp.eq.s32.totalorder %s24, 1
      %p56 = por %p54, %p55
      %p57 = scmp.ne.s32.totalorder %s46, %s47
      %p58 = scmp.eq.s32.totalorder %s24, 0
      %p59 = por %p57, %p58
      %p60 = scmp.ne.s32.totalorder %s46, %s47
      %p61 = scmp.eq.s32.totalorder %s25, 1
      %p62 = por %p60, %p61
      %p64 = scmp.ne.s32.totalorder %s47, %s63
      %p65 = scmp.eq.s32.totalorder %s25, 0
      %p66 = por %p64, %p65
      %s67 = ssub.s32 %s26, %s38
      %s68 = ssub.s32 %s27, %s34
      %s69 = sor.u32 %s67, %s68
      %p70 = scmp.eq.s32.totalorder %s69, 0
      %s72 = sadd.s32 %s71, 1
      %s73 = scalar_select %p70, %s71, %s72
      %p76 = pneg %p70
      %p77 = scmp.eq.s32.totalorder %s19, 1
      %p78 = por %p76, %p77
      %p79 = scmp.ne.s32.totalorder %s71, %s74
      %p80 = scmp.eq.s32.totalorder %s19, 0
      %p81 = por %p79, %p80
      %p82 = scmp.ne.s32.totalorder %s71, %s74
      %p83 = scmp.eq.s32.totalorder %s24, 1
      %p84 = por %p82, %p83
      %p85 = scmp.ne.s32.totalorder %s74, %s75
      %p86 = scmp.eq.s32.totalorder %s24, 0
      %p87 = por %p85, %p86
      %p88 = scmp.ne.s32.totalorder %s74, %s75
      %p89 = scmp.eq.s32.totalorder %s25, 1
      %p90 = por %p88, %p89
      %p92 = scmp.ne.s32.totalorder %s75, %s91
      %p93 = scmp.eq.s32.totalorder %s25, 0
      %p94 = por %p92, %p93
      %s95 = ssub.s32 %s26, %s38
      %p96 = scmp.eq.s32.totalorder %s95, 0
      %s98 = sadd.s32 %s97, 1
      %s99 = scalar_select %p96, %s97, %s98
      %p102 = pneg %p96
      %p103 = scmp.eq.s32.totalorder %s19, 1
      %p104 = por %p102, %p103
      %p105 = scmp.ne.s32.totalorder %s97, %s100
      %p106 = scmp.eq.s32.totalorder %s19, 0
      %p107 = por %p105, %p106
      %p108 = scmp.ne.s32.totalorder %s97, %s100
      %p109 = scmp.eq.s32.totalorder %s24, 1
      %p110 = por %p108, %p109
      %p111 = scmp.ne.s32.totalorder %s100, %s101
      %p112 = scmp.eq.s32.totalorder %s24, 0
      %p113 = por %p111, %p112
      %p114 = scmp.ne.s32.totalorder %s100, %s101
      %p115 = scmp.eq.s32.totalorder %s25, 1
      %p116 = por %p114, %p115
      %p118 = scmp.ne.s32.totalorder %s101, %s117
      %p119 = scmp.eq.s32.totalorder %s25, 0
      %p120 = por %p118, %p119
      %s121 = ssub.s32 %s26, %s38
      %p122 = scmp.eq.s32.totalorder %s121, 0
      %s124 = sadd.s32 %s123, 1
      %s125 = scalar_select %p122, %s123, %s124
      %p128 = pneg %p122
      %p129 = scmp.eq.s32.totalorder %s19, 1
      %p130 = por %p128, %p129
      %p131 = scmp.ne.s32.totalorder %s123, %s126
      %p132 = scmp.eq.s32.totalorder %s19, 0
      %p133 = por %p131, %p132
      %p134 = scmp.ne.s32.totalorder %s123, %s126
      %p135 = scmp.eq.s32.totalorder %s24, 1
      %p136 = por %p134, %p135
      %p137 = scmp.ne.s32.totalorder %s126, %s127
      %p138 = scmp.eq.s32.totalorder %s24, 0
      %p139 = por %p137, %p138
      %p140 = scmp.ne.s32.totalorder %s126, %s127
      %p141 = scmp.eq.s32.totalorder %s25, 1
      %p142 = por %p140, %p141
      %p144 = scmp.ne.s32.totalorder %s127, %s143
      %p145 = scmp.eq.s32.totalorder %s25, 0
      %p146 = por %p144, %p145
      %s147 = ssub.s32 %s26, %s38
      %p148 = scmp.eq.s32.totalorder %s147, 0
      %s150 = sadd.s32 %s149, 1
      %s151 = scalar_select %p148, %s149, %s150
      %p154 = pneg %p148
      %p155 = scmp.eq.s32.totalorder %s19, 1
      %p156 = por %p154, %p155
      %p157 = scmp.ne.s32.totalorder %s149, %s152
      %p158 = scmp.eq.s32.totalorder %s19, 0
      %p159 = por %p157, %p158
      %p160 = scmp.ne.s32.totalorder %s149, %s152
      %p161 = scmp.eq.s32.totalorder %s24, 1
      %p162 = por %p160, %p161
      %p163 = scmp.ne.s32.totalorder %s152, %s153
      %p164 = scmp.eq.s32.totalorder %s24, 0
      %p165 = por %p163, %p164
      %p166 = scmp.ne.s32.totalorder %s152, %s153
      %p167 = scmp.eq.s32.totalorder %s25, 1
      %p168 = por %p166, %p167
      %p170 = scmp.ne.s32.totalorder %s153, %s169
      %p171 = scmp.eq.s32.totalorder %s25, 0
      %p172 = por %p170, %p171
      %s174 = sadd.s32 %s173, 1
      %p177 = scmp.eq.s32.totalorder %s19, 1
      %p178 = scmp.ne.s32.totalorder %s173, %s175
      %p179 = scmp.eq.s32.totalorder %s19, 0
      %p180 = por %p178, %p179
      %p181 = scmp.ne.s32.totalorder %s173, %s175
      %p182 = scmp.eq.s32.totalorder %s24, 1
      %p183 = por %p181, %p182
      %p184 = scmp.ne.s32.totalorder %s175, %s176
      %p185 = scmp.eq.s32.totalorder %s24, 0
      %p186 = por %p184, %p185
      %p187 = scmp.ne.s32.totalorder %s175, %s176
      %p188 = scmp.eq.s32.totalorder %s25, 1
      %p189 = por %p187, %p188
      %p191 = scmp.ne.s32.totalorder %s176, %s190
      %p192 = scmp.eq.s32.totalorder %s25, 0
      %p193 = por %p191, %p192
      %s195 = sadd.s32 %s194, 1
      %p198 = scmp.eq.s32.totalorder %s19, 1
      %p199 = scmp.ne.s32.totalorder %s194, %s196
      %p200 = scmp.eq.s32.totalorder %s19, 0
      %p201 = por %p199, %p200
      %p202 = scmp.ne.s32.totalorder %s194, %s196
      %p203 = scmp.eq.s32.totalorder %s24, 1
      %p204 = por %p202, %p203
      %p205 = scmp.ne.s32.totalorder %s196, %s197
      %p206 = scmp.eq.s32.totalorder %s24, 0
      %p207 = por %p205, %p206
      %p208 = scmp.ne.s32.totalorder %s196, %s197
      %p209 = scmp.eq.s32.totalorder %s25, 1
      %p210 = por %p208, %p209
      %p212 = scmp.ne.s32.totalorder %s197, %s211
      %p213 = scmp.eq.s32.totalorder %s25, 0
      %p214 = por %p212, %p213
      %s215 = ssub.s32 %s26, %s38
      %p216 = scmp.eq.s32.totalorder %s215, 0
      %s218 = sadd.s32 %s217, 1
      %s219 = scalar_select %p216, %s217, %s218
      %p222 = pneg %p216
      %p223 = scmp.eq.s32.totalorder %s19, 1
      %p224 = por %p222, %p223
      %p225 = scmp.ne.s32.totalorder %s217, %s220
      %p226 = scmp.eq.s32.totalorder %s19, 0
      %p227 = por %p225, %p226
      %p228 = scmp.ne.s32.totalorder %s217, %s220
      %p229 = scmp.eq.s32.totalorder %s24, 1
      %p230 = por %p228, %p229
      %p231 = scmp.ne.s32.totalorder %s220, %s221
      %p232 = scmp.eq.s32.totalorder %s24, 0
      %p233 = por %p231, %p232
      %p234 = scmp.ne.s32.totalorder %s220, %s221
      %p235 = scmp.eq.s32.totalorder %s25, 1
      %p236 = por %p234, %p235
      %p238 = scmp.ne.s32.totalorder %s221, %s237
      %p239 = scmp.eq.s32.totalorder %s25, 0
      %p240 = por %p238, %p239
      %p241 = scmp.le.s32.totalorder 1, %s19
      %p242 = scmp.lt.s32.totalorder %s19, 3
      %p243 = pnand %p241, %p242
      %p244 = pneg %p243
      // Predicated region
      $region9: #{paired_smile_forward.1} parent=5 // pred_check
        _
      $region10: #{paired_smile_forward.1} parent=5 // pred_check_branch
        %246 = sbr.rel (%p243) target = $region12
      $region11: #{paired_smile_forward.1} parent=5 // pred_region
        %s247 = ssub.s32 %s19, 1
        // Predicated region
        $region13: #{paired_smile_forward.1} parent=11 // pred_check
          %p248 = pneg %p186
        $region14: #{paired_smile_forward.1} parent=11 // pred_check_branch
          %250 = sbr.rel (%p248) target = $region16
        $region15: #{paired_smile_forward.1} parent=11 // pred_region
          _
        $region16: #{paired_smile_forward.1} parent=11 // pred_fallthru
          _
        // Predicated region
        $region17: #{paired_smile_forward.1} parent=11 // pred_check
          %p251 = pneg %p207
        $region18: #{paired_smile_forward.1} parent=11 // pred_check_branch
          %253 = sbr.rel (%p251) target = $region20
        $region19: #{paired_smile_forward.1} parent=11 // pred_region
          _
        $region20: #{paired_smile_forward.1} parent=11 // pred_fallthru
          _
      $region12: #{paired_smile_forward.1} parent=5 // pred_fallthru
        _
      %p254 = scmp.lt.s32.totalorder %s19, 2
      // Predicated region
      $region21: #{paired_smile_forward.1} parent=5 // pred_check
        %p255 = pneg %p254
      $region22: #{paired_smile_forward.1} parent=5 // pred_check_branch
        %257 = sbr.rel (%p255) target = $region24
      $region23: #{paired_smile_forward.1} parent=5 // pred_region
        // Predicated region
        $region25: #{paired_smile_forward.1} parent=23 // pred_check
          %p258 = pneg %p53
        $region26: #{paired_smile_forward.1} parent=23 // pred_check_branch
          %260 = sbr.rel (%p258) target = $region28
        $region27: #{paired_smile_forward.1} parent=23 // pred_region
          %s261 = smul.u32 2, %s27
          %p262 = scmp.lt.s32.totalorder %s26, 1
          %s263 = scalar_select %p262, %s26, 1
          %p264 = scmp.lt.s32.totalorder %s261, 1
          %s265 = scalar_select %p264, %s261, 1
          %s266 = smul.addr %s263, 2
          %s267 = sadd.s32 %s265, %s266
          %s268 = smul.addr %s267, 4
          %s269 = scalar_lea.vmem %s0, %s268
          %s270 = smul.u32 2, %s27
        $region28: #{paired_smile_forward.1} parent=23 // pred_fallthru
          _
        // Predicated region
        $region29: #{paired_smile_forward.1} parent=23 // pred_check
          %p271 = pneg %p81
        $region30: #{paired_smile_forward.1} parent=23 // pred_check_branch
          %273 = sbr.rel (%p271) target = $region32
        $region31: #{paired_smile_forward.1} parent=23 // pred_region
          %s274 = sand.u32 %s71, 1
          %s275 = scalar_lea.sflag [#allocation4], %s274
          %s276 = sand.u32 %s71, 1
          %s277 = smul.addr %s276, 1024
          %s278 = scalar_lea.vmem [#allocation3], %s277
          %s279 = smul.u32 32, %s27
          %s281 = ssub.s32 16384, 16384
          %282 = vsyncadd %s275, %s281
          %s283 = smul.addr %s279, 8
          %s284 = smul.addr %s26, 256
          %s285 = sadd.s32 %s283, %s284
          %s286 = smul.addr %s285, 64
          %s287 = scalar_lea.hbm %s1, %s286
          %s288 = sshll.u32 %s278, 4
          %s289 = int_to_ptr.vmem [resolvable:$true] %s288
          %294 = dma.hbm_to_vmem [thread:$0]  %s287, 16384, %s289, %s275, 512, 512, 32
        $region32: #{paired_smile_forward.1} parent=23 // pred_fallthru
          _
        // Predicated region
        $region33: #{paired_smile_forward.1} parent=23 // pred_check
          %p295 = pneg %p107
        $region34: #{paired_smile_forward.1} parent=23 // pred_check_branch
          %297 = sbr.rel (%p295) target = $region36
        $region35: #{paired_smile_forward.1} parent=23 // pred_region
          %p298 = scmp.lt.s32.totalorder %s26, 1
          %s299 = scalar_select %p298, %s26, 1
          %s300 = smul.addr %s299, 8
          %s301 = smul.addr %s300, 2
          %s302 = scalar_lea.vmem %s2, %s301
        $region36: #{paired_smile_forward.1} parent=23 // pred_fallthru
          _
        // Predicated region
        $region37: #{paired_smile_forward.1} parent=23 // pred_check
          %p303 = pneg %p133
        $region38: #{paired_smile_forward.1} parent=23 // pred_check_branch
          %305 = sbr.rel (%p303) target = $region40
        $region39: #{paired_smile_forward.1} parent=23 // pred_region
          %s306 = sand.u32 %s123, 1
          %s307 = scalar_lea.sflag [#allocation6], %s306
          %s308 = sand.u32 %s123, 1
          %s309 = smul.addr %s308, 512
          %s310 = scalar_lea.vmem [#allocation5], %s309
          %s312 = ssub.s32 8192, 8192
          %313 = vsyncadd %s307, %s312
          %s314 = smul.addr %s26, 128
          %s315 = smul.addr %s314, 64
          %s316 = scalar_lea.hbm %s3, %s315
          %s317 = sshll.u32 %s310, 4
          %s318 = int_to_ptr.vmem [resolvable:$true] %s317
          %323 = dma.hbm_to_vmem [thread:$0]  %s316, 8192, %s318, %s307, 64, 64, 4
        $region40: #{paired_smile_forward.1} parent=23 // pred_fallthru
          _
        // Predicated region
        $region41: #{paired_smile_forward.1} parent=23 // pred_check
          %p324 = pneg %p159
        $region42: #{paired_smile_forward.1} parent=23 // pred_check_branch
          %326 = sbr.rel (%p324) target = $region44
        $region43: #{paired_smile_forward.1} parent=23 // pred_region
          %p327 = scmp.lt.s32.totalorder %s26, 1
          %s328 = scalar_select %p327, %s26, 1
          %s329 = smul.addr %s328, 2
          %s330 = scalar_lea.vmem %s4, %s329
        $region44: #{paired_smile_forward.1} parent=23 // pred_fallthru
          _
      $region24: #{paired_smile_forward.1} parent=5 // pred_fallthru
        _
      %p331 = scmp.le.s32.totalorder 1, %s19
      %p332 = scmp.lt.s32.totalorder %s19, 3
      %p333 = pnand %p331, %p332
      %p334 = pneg %p333
      // Predicated region
      $region45: #{paired_smile_forward.1} parent=5 // pred_check
        _
      $region46: #{paired_smile_forward.1} parent=5 // pred_check_branch
        %336 = sbr.rel (%p333) target = $region48
      $region47: #{paired_smile_forward.1} parent=5 // pred_region
        %s337 = ssub.s32 %s19, 1
        %s338 = sand.u32 %s74, 1
        %s339 = scalar_lea.sflag [#allocation4], %s338
        %s340 = sand.u32 %s74, 1
        %s341 = smul.addr %s340, 1024
        %s342 = scalar_lea.vmem [#allocation3], %s341
        // Predicated region
        $region49: #{paired_smile_forward.1} parent=47 // pred_check
          %p343 = pneg %p87
        $region50: #{paired_smile_forward.1} parent=47 // pred_check_branch
          %345 = sbr.rel (%p343) target = $region52
        $region51: #{paired_smile_forward.1} parent=47 // pred_region
          %346 = dma.done %s339, 16384
        $region52: #{paired_smile_forward.1} parent=47 // pred_fallthru
          _
        %s347 = sand.u32 %s126, 1
        %s348 = scalar_lea.sflag [#allocation6], %s347
        %s349 = sand.u32 %s126, 1
        %s350 = smul.addr %s349, 512
        %s351 = scalar_lea.vmem [#allocation5], %s350
        // Predicated region
        $region53: #{paired_smile_forward.1} parent=47 // pred_check
          %p352 = pneg %p139
        $region54: #{paired_smile_forward.1} parent=47 // pred_check_branch
          %354 = sbr.rel (%p352) target = $region56
        $region55: #{paired_smile_forward.1} parent=47 // pred_region
          %355 = dma.done %s348, 8192
        $region56: #{paired_smile_forward.1} parent=47 // pred_fallthru
          _
        %s356 = smul.u32 2, %s29
        %p357 = scmp.lt.s32.totalorder %s28, 1
        %s358 = scalar_select %p357, %s28, 1
        %p359 = scmp.lt.s32.totalorder %s356, 1
        %s360 = scalar_select %p359, %s356, 1
        %s361 = smul.addr %s358, 2
        %s362 = sadd.s32 %s360, %s361
        %s363 = smul.addr %s362, 4
        %s364 = scalar_lea.vmem %s0, %s363
        %p365 = pneg %p59
        %p366 = pneg %p56
        %s367 = sand.u32 %s74, 1
        %s368 = scalar_lea.sflag [#allocation4], %s367
        %s369 = sand.u32 %s74, 1
        %s370 = smul.addr %s369, 1024
        %s371 = scalar_lea.vmem [#allocation3], %s370
        %p372 = pneg %p87
        %p373 = pneg %p84
        %p374 = scmp.lt.s32.totalorder %s28, 1
        %s375 = scalar_select %p374, %s28, 1
        %s376 = smul.addr %s375, 8
        %s377 = smul.addr %s376, 2
        %s378 = scalar_lea.vmem %s2, %s377
        %p379 = pneg %p113
        %p380 = pneg %p110
        %s381 = sand.u32 %s126, 1
        %s382 = scalar_lea.sflag [#allocation6], %s381
        %s383 = sand.u32 %s126, 1
        %s384 = smul.addr %s383, 512
        %s385 = scalar_lea.vmem [#allocation5], %s384
        %p386 = pneg %p139
        %p387 = pneg %p136
        %p388 = scmp.lt.s32.totalorder %s28, 1
        %s389 = scalar_select %p388, %s28, 1
        %s390 = smul.addr %s389, 2
        %s391 = scalar_lea.vmem %s4, %s390
        %p392 = pneg %p165
        %p393 = pneg %p162
        %p394 = pneg %p186
        %p395 = pneg %p183
        %p396 = pneg %p207
        %p397 = pneg %p204
        %p398 = pneg %p233
        %p399 = pneg %p230
        %p400 = scmp.lt.s32.totalorder %s28, 1
        %s401 = scalar_select %p400, %s28, 1
        %s402 = smul.addr %s401, 8
        %s403 = scalar_lea.vmem %s7, %s402
        %s404 = smul.u32 2, %s29
        %p405 = scmp.lt.s32.totalorder %s28, 1
        %s406 = scalar_select %p405, %s28, 1
        %p407 = scmp.lt.s32.totalorder %s404, 1
        %s408 = scalar_select %p407, %s404, 1
        %s409 = smul.addr %s406, 2
        %s410 = sadd.s32 %s408, %s409
        %s411 = smul.addr %s410, 4
        %s412 = scalar_lea.vmem %s0, %s411
        %s413 = smul.u32 2, %s29
        %s414 = smul.u32 32, %s29
        %p415 = scmp.lt.s32.totalorder %s28, 1
        %s416 = scalar_select %p415, %s28, 1
        %s417 = smul.addr %s416, 8
        %s418 = smul.addr %s417, 2
        %s419 = scalar_lea.vmem %s2, %s418
        %p420 = scmp.lt.s32.totalorder %s28, 1
        %s421 = scalar_select %p420, %s28, 1
        %s422 = smul.addr %s421, 2
        %s423 = scalar_lea.vmem %s4, %s422
        %p424 = scmp.lt.s32.totalorder %s28, 1
        %s425 = scalar_select %p424, %s28, 1
        %s426 = smul.addr %s425, 8
        %s427 = scalar_lea.vmem %s7, %s426
        %p429 = scmp.eq.s32.totalorder %s29, 0
        // Predicated region
        $region57: #{paired_smile_forward.1} parent=47 // pred_check
          %p430 = pneg %p429
        $region58: #{paired_smile_forward.1} parent=47 // pred_check_branch
          %432 = sbr.rel (%p430) target = $region60
        $region59: #{paired_smile_forward.1} parent=47 // pred_region
          %433 = vst [vmem:[#allocation2] sm:$0xff] 0.0
          %434 = vst [vmem:[#allocation2 + $0x8] sm:$0xff] 0.0
          %435 = vst [vmem:[#allocation2 + $0x10] sm:$0xff] 0.0
          %436 = vst [vmem:[#allocation2 + $0x18] sm:$0xff] 0.0
          %437 = vst [vmem:[#allocation2 + $0x20] sm:$0xff] 0.0
          %438 = vst [vmem:[#allocation2 + $0x28] sm:$0xff] 0.0
          %439 = vst [vmem:[#allocation2 + $0x30] sm:$0xff] 0.0
          %440 = vst [vmem:[#allocation2 + $0x38] sm:$0xff] 0.0
        $region60: #{paired_smile_forward.1} parent=47 // pred_fallthru
          _
        %v441 = vld [vmem:[#allocation2] sm:$0xff]
        %v442 = vld [vmem:[#allocation2 + $0x8] sm:$0xff]
        %v443 = vld [vmem:[#allocation2 + $0x10] sm:$0xff]
        %v444 = vld [vmem:[#allocation2 + $0x18] sm:$0xff]
        %v445 = vld [vmem:[#allocation2 + $0x20] sm:$0xff]
        %v446 = vld [vmem:[#allocation2 + $0x28] sm:$0xff]
        %v447 = vld [vmem:[#allocation2 + $0x30] sm:$0xff]
        %v448 = vld [vmem:[#allocation2 + $0x38] sm:$0xff]
        %v449 = vld [vmem:[%s412] sm:$0xff]
        %v450 = vld [vmem:[%s342] sm:$0xff]
        %v451 = vld [vmem:[%s342 + $0x8] sm:$0xff]
        %v452 = vld [vmem:[%s342 + $0x10] sm:$0xff]
        %v453 = vld [vmem:[%s342 + $0x18] sm:$0xff]
        %v454 = vld [vmem:[%s342 + $0x20] sm:$0xff]
        %v455 = vld [vmem:[%s342 + $0x28] sm:$0xff]
        %v456 = vld [vmem:[%s342 + $0x30] sm:$0xff]
        %v457 = vld [vmem:[%s342 + $0x38] sm:$0xff]
        %v458 = vld [vmem:[%s342 + $0x40] sm:$0xff]
        %v459 = vld [vmem:[%s342 + $0x48] sm:$0xff]
        %v460 = vld [vmem:[%s342 + $0x50] sm:$0xff]
        %v461 = vld [vmem:[%s342 + $0x58] sm:$0xff]
        %v462 = vld [vmem:[%s342 + $0x60] sm:$0xff]
        %v463 = vld [vmem:[%s342 + $0x68] sm:$0xff]
        %v464 = vld [vmem:[%s342 + $0x70] sm:$0xff]
        %v465 = vld [vmem:[%s342 + $0x78] sm:$0xff]
        %v466 = vld [vmem:[%s342 + $0x80] sm:$0xff]
        %v467 = vld [vmem:[%s342 + $0x88] sm:$0xff]
        %v468 = vld [vmem:[%s342 + $0x90] sm:$0xff]
        %v469 = vld [vmem:[%s342 + $0x98] sm:$0xff]
        %v470 = vld [vmem:[%s342 + $0xa0] sm:$0xff]
        %v471 = vld [vmem:[%s342 + $0xa8] sm:$0xff]
        %v472 = vld [vmem:[%s342 + $0xb0] sm:$0xff]
        %v473 = vld [vmem:[%s342 + $0xb8] sm:$0xff]
        %v474 = vld [vmem:[%s342 + $0xc0] sm:$0xff]
        %v475 = vld [vmem:[%s342 + $0xc8] sm:$0xff]
        %v476 = vld [vmem:[%s342 + $0xd0] sm:$0xff]
        %v477 = vld [vmem:[%s342 + $0xd8] sm:$0xff]
        %v478 = vld [vmem:[%s342 + $0xe0] sm:$0xff]
        %v479 = vld [vmem:[%s342 + $0xe8] sm:$0xff]
        %v480 = vld [vmem:[%s342 + $0xf0] sm:$0xff]
        %v481 = vld [vmem:[%s342 + $0xf8] sm:$0xff]
        %v482 = vld [vmem:[%s342 + $0x100] sm:$0xff]
        %v483 = vld [vmem:[%s342 + $0x108] sm:$0xff]
        %v484 = vld [vmem:[%s342 + $0x110] sm:$0xff]
        %v485 = vld [vmem:[%s342 + $0x118] sm:$0xff]
        %v486 = vld [vmem:[%s342 + $0x120] sm:$0xff]
        %v487 = vld [vmem:[%s342 + $0x128] sm:$0xff]
        %v488 = vld [vmem:[%s342 + $0x130] sm:$0xff]
        %v489 = vld [vmem:[%s342 + $0x138] sm:$0xff]
        %v490 = vld [vmem:[%s342 + $0x140] sm:$0xff]
        %v491 = vld [vmem:[%s342 + $0x148] sm:$0xff]
        %v492 = vld [vmem:[%s342 + $0x150] sm:$0xff]
        %v493 = vld [vmem:[%s342 + $0x158] sm:$0xff]
        %v494 = vld [vmem:[%s342 + $0x160] sm:$0xff]
        %v495 = vld [vmem:[%s342 + $0x168] sm:$0xff]
        %v496 = vld [vmem:[%s342 + $0x170] sm:$0xff]
        %v497 = vld [vmem:[%s342 + $0x178] sm:$0xff]
        %v498 = vld [vmem:[%s342 + $0x180] sm:$0xff]
        %v499 = vld [vmem:[%s342 + $0x188] sm:$0xff]
        %v500 = vld [vmem:[%s342 + $0x190] sm:$0xff]
        %v501 = vld [vmem:[%s342 + $0x198] sm:$0xff]
        %v502 = vld [vmem:[%s342 + $0x1a0] sm:$0xff]
        %v503 = vld [vmem:[%s342 + $0x1a8] sm:$0xff]
        %v504 = vld [vmem:[%s342 + $0x1b0] sm:$0xff]
        %v505 = vld [vmem:[%s342 + $0x1b8] sm:$0xff]
        %v506 = vld [vmem:[%s342 + $0x1c0] sm:$0xff]
        %v507 = vld [vmem:[%s342 + $0x1c8] sm:$0xff]
        %v508 = vld [vmem:[%s342 + $0x1d0] sm:$0xff]
        %v509 = vld [vmem:[%s342 + $0x1d8] sm:$0xff]
        %v510 = vld [vmem:[%s342 + $0x1e0] sm:$0xff]
        %v511 = vld [vmem:[%s342 + $0x1e8] sm:$0xff]
        %v512 = vld [vmem:[%s342 + $0x1f0] sm:$0xff]
        %v513 = vld [vmem:[%s342 + $0x1f8] sm:$0xff]
        %v514 = vld [vmem:[%s342 + $0x200] sm:$0xff]
        %v515 = vld [vmem:[%s342 + $0x208] sm:$0xff]
        %v516 = vld [vmem:[%s342 + $0x210] sm:$0xff]
        %v517 = vld [vmem:[%s342 + $0x218] sm:$0xff]
        %v518 = vld [vmem:[%s342 + $0x220] sm:$0xff]
        %v519 = vld [vmem:[%s342 + $0x228] sm:$0xff]
        %v520 = vld [vmem:[%s342 + $0x230] sm:$0xff]
        %v521 = vld [vmem:[%s342 + $0x238] sm:$0xff]
        %v522 = vld [vmem:[%s342 + $0x240] sm:$0xff]
        %v523 = vld [vmem:[%s342 + $0x248] sm:$0xff]
        %v524 = vld [vmem:[%s342 + $0x250] sm:$0xff]
        %v525 = vld [vmem:[%s342 + $0x258] sm:$0xff]
        %v526 = vld [vmem:[%s342 + $0x260] sm:$0xff]
        %v527 = vld [vmem:[%s342 + $0x268] sm:$0xff]
        %v528 = vld [vmem:[%s342 + $0x270] sm:$0xff]
        %v529 = vld [vmem:[%s342 + $0x278] sm:$0xff]
        %v530 = vld [vmem:[%s342 + $0x280] sm:$0xff]
        %v531 = vld [vmem:[%s342 + $0x288] sm:$0xff]
        %v532 = vld [vmem:[%s342 + $0x290] sm:$0xff]
        %v533 = vld [vmem:[%s342 + $0x298] sm:$0xff]
        %v534 = vld [vmem:[%s342 + $0x2a0] sm:$0xff]
        %v535 = vld [vmem:[%s342 + $0x2a8] sm:$0xff]
        %v536 = vld [vmem:[%s342 + $0x2b0] sm:$0xff]
        %v537 = vld [vmem:[%s342 + $0x2b8] sm:$0xff]
        %v538 = vld [vmem:[%s342 + $0x2c0] sm:$0xff]
        %v539 = vld [vmem:[%s342 + $0x2c8] sm:$0xff]
        %v540 = vld [vmem:[%s342 + $0x2d0] sm:$0xff]
        %v541 = vld [vmem:[%s342 + $0x2d8] sm:$0xff]
        %v542 = vld [vmem:[%s342 + $0x2e0] sm:$0xff]
        %v543 = vld [vmem:[%s342 + $0x2e8] sm:$0xff]
        %v544 = vld [vmem:[%s342 + $0x2f0] sm:$0xff]
        %v545 = vld [vmem:[%s342 + $0x2f8] sm:$0xff]
        %v546 = vld [vmem:[%s342 + $0x300] sm:$0xff]
        %v547 = vld [vmem:[%s342 + $0x308] sm:$0xff]
        %v548 = vld [vmem:[%s342 + $0x310] sm:$0xff]
        %v549 = vld [vmem:[%s342 + $0x318] sm:$0xff]
        %v550 = vld [vmem:[%s342 + $0x320] sm:$0xff]
        %v551 = vld [vmem:[%s342 + $0x328] sm:$0xff]
        %v552 = vld [vmem:[%s342 + $0x330] sm:$0xff]
        %v553 = vld [vmem:[%s342 + $0x338] sm:$0xff]
        %v554 = vld [vmem:[%s342 + $0x340] sm:$0xff]
        %v555 = vld [vmem:[%s342 + $0x348] sm:$0xff]
        %v556 = vld [vmem:[%s342 + $0x350] sm:$0xff]
        %v557 = vld [vmem:[%s342 + $0x358] sm:$0xff]
        %v558 = vld [vmem:[%s342 + $0x360] sm:$0xff]
        %v559 = vld [vmem:[%s342 + $0x368] sm:$0xff]
        %v560 = vld [vmem:[%s342 + $0x370] sm:$0xff]
        %v561 = vld [vmem:[%s342 + $0x378] sm:$0xff]
        %v562 = vld [vmem:[%s342 + $0x380] sm:$0xff]
        %v563 = vld [vmem:[%s342 + $0x388] sm:$0xff]
        %v564 = vld [vmem:[%s342 + $0x390] sm:$0xff]
        %v565 = vld [vmem:[%s342 + $0x398] sm:$0xff]
        %v566 = vld [vmem:[%s342 + $0x3a0] sm:$0xff]
        %v567 = vld [vmem:[%s342 + $0x3a8] sm:$0xff]
        %v568 = vld [vmem:[%s342 + $0x3b0] sm:$0xff]
        %v569 = vld [vmem:[%s342 + $0x3b8] sm:$0xff]
        %v570 = vld [vmem:[%s342 + $0x3c0] sm:$0xff]
        %v571 = vld [vmem:[%s342 + $0x3c8] sm:$0xff]
        %v572 = vld [vmem:[%s342 + $0x3d0] sm:$0xff]
        %v573 = vld [vmem:[%s342 + $0x3d8] sm:$0xff]
        %v574 = vld [vmem:[%s342 + $0x3e0] sm:$0xff]
        %v575 = vld [vmem:[%s342 + $0x3e8] sm:$0xff]
        %v576 = vld [vmem:[%s342 + $0x3f0] sm:$0xff]
        %v577 = vld [vmem:[%s342 + $0x3f8] sm:$0xff]
        %v579 = vunpack.c.l.b16 %v449
        %v580 = vunpack.c.h.b16 %v449
        %v581 = vpack.c.b16 %v579, %v579
        %v582 = vpack.c.b16 %v580, %v580
        %v713 = vunpack.c.l.b16 %v450
        %v714 = vunpack.c.h.b16 %v450
        %v715 = vunpack.c.l.b16 %v451
        %v716 = vunpack.c.h.b16 %v451
        %v717 = vunpack.c.l.b16 %v452
        %v718 = vunpack.c.h.b16 %v452
        %v719 = vunpack.c.l.b16 %v453
        %v720 = vunpack.c.h.b16 %v453
        %v721 = vunpack.c.l.b16 %v454
        %v722 = vunpack.c.h.b16 %v454
        %v723 = vunpack.c.l.b16 %v455
        %v724 = vunpack.c.h.b16 %v455
        %v725 = vunpack.c.l.b16 %v456
        %v726 = vunpack.c.h.b16 %v456
        %v727 = vunpack.c.l.b16 %v457
        %v728 = vunpack.c.h.b16 %v457
        %v729 = vunpack.c.l.b16 %v458
        %v730 = vunpack.c.h.b16 %v458
        %v731 = vunpack.c.l.b16 %v459
        %v732 = vunpack.c.h.b16 %v459
        %v733 = vunpack.c.l.b16 %v460
        %v734 = vunpack.c.h.b16 %v460
        %v735 = vunpack.c.l.b16 %v461
        %v736 = vunpack.c.h.b16 %v461
        %v737 = vunpack.c.l.b16 %v462
        %v738 = vunpack.c.h.b16 %v462
        %v739 = vunpack.c.l.b16 %v463
        %v740 = vunpack.c.h.b16 %v463
        %v741 = vunpack.c.l.b16 %v464
        %v742 = vunpack.c.h.b16 %v464
        %v743 = vunpack.c.l.b16 %v465
        %v744 = vunpack.c.h.b16 %v465
        %v745 = vunpack.c.l.b16 %v466
        %v746 = vunpack.c.h.b16 %v466
        %v747 = vunpack.c.l.b16 %v467
        %v748 = vunpack.c.h.b16 %v467
        %v749 = vunpack.c.l.b16 %v468
        %v750 = vunpack.c.h.b16 %v468
        %v751 = vunpack.c.l.b16 %v469
        %v752 = vunpack.c.h.b16 %v469
        %v753 = vunpack.c.l.b16 %v470
        %v754 = vunpack.c.h.b16 %v470
        %v755 = vunpack.c.l.b16 %v471
        %v756 = vunpack.c.h.b16 %v471
        %v757 = vunpack.c.l.b16 %v472
        %v758 = vunpack.c.h.b16 %v472
        %v759 = vunpack.c.l.b16 %v473
        %v760 = vunpack.c.h.b16 %v473
        %v761 = vunpack.c.l.b16 %v474
        %v762 = vunpack.c.h.b16 %v474
        %v763 = vunpack.c.l.b16 %v475
        %v764 = vunpack.c.h.b16 %v475
        %v765 = vunpack.c.l.b16 %v476
        %v766 = vunpack.c.h.b16 %v476
        %v767 = vunpack.c.l.b16 %v477
        %v768 = vunpack.c.h.b16 %v477
        %v769 = vunpack.c.l.b16 %v478
        %v770 = vunpack.c.h.b16 %v478
        %v771 = vunpack.c.l.b16 %v479
        %v772 = vunpack.c.h.b16 %v479
        %v773 = vunpack.c.l.b16 %v480
        %v774 = vunpack.c.h.b16 %v480
        %v775 = vunpack.c.l.b16 %v481
        %v776 = vunpack.c.h.b16 %v481
        %v777 = vunpack.c.l.b16 %v482
        %v778 = vunpack.c.h.b16 %v482
        %v779 = vunpack.c.l.b16 %v483
        %v780 = vunpack.c.h.b16 %v483
        %v781 = vunpack.c.l.b16 %v484
        %v782 = vunpack.c.h.b16 %v484
        %v783 = vunpack.c.l.b16 %v485
        %v784 = vunpack.c.h.b16 %v485
        %v785 = vunpack.c.l.b16 %v486
        %v786 = vunpack.c.h.b16 %v486
        %v787 = vunpack.c.l.b16 %v487
        %v788 = vunpack.c.h.b16 %v487
        %v789 = vunpack.c.l.b16 %v488
        %v790 = vunpack.c.h.b16 %v488
        %v791 = vunpack.c.l.b16 %v489
        %v792 = vunpack.c.h.b16 %v489
        %v793 = vunpack.c.l.b16 %v490
        %v794 = vunpack.c.h.b16 %v490
        %v795 = vunpack.c.l.b16 %v491
        %v796 = vunpack.c.h.b16 %v491
        %v797 = vunpack.c.l.b16 %v492
        %v798 = vunpack.c.h.b16 %v492
        %v799 = vunpack.c.l.b16 %v493
        %v800 = vunpack.c.h.b16 %v493
        %v801 = vunpack.c.l.b16 %v494
        %v802 = vunpack.c.h.b16 %v494
        %v803 = vunpack.c.l.b16 %v495
        %v804 = vunpack.c.h.b16 %v495
        %v805 = vunpack.c.l.b16 %v496
        %v806 = vunpack.c.h.b16 %v496
        %v807 = vunpack.c.l.b16 %v497
        %v808 = vunpack.c.h.b16 %v497
        %v809 = vunpack.c.l.b16 %v498
        %v810 = vunpack.c.h.b16 %v498
        %v811 = vunpack.c.l.b16 %v499
        %v812 = vunpack.c.h.b16 %v499
        %v813 = vunpack.c.l.b16 %v500
        %v814 = vunpack.c.h.b16 %v500
        %v815 = vunpack.c.l.b16 %v501
        %v816 = vunpack.c.h.b16 %v501
        %v817 = vunpack.c.l.b16 %v502
        %v818 = vunpack.c.h.b16 %v502
        %v819 = vunpack.c.l.b16 %v503
        %v820 = vunpack.c.h.b16 %v503
        %v821 = vunpack.c.l.b16 %v504
        %v822 = vunpack.c.h.b16 %v504
        %v823 = vunpack.c.l.b16 %v505
        %v824 = vunpack.c.h.b16 %v505
        %v825 = vunpack.c.l.b16 %v506
        %v826 = vunpack.c.h.b16 %v506
        %v827 = vunpack.c.l.b16 %v507
        %v828 = vunpack.c.h.b16 %v507
        %v829 = vunpack.c.l.b16 %v508
        %v830 = vunpack.c.h.b16 %v508
        %v831 = vunpack.c.l.b16 %v509
        %v832 = vunpack.c.h.b16 %v509
        %v833 = vunpack.c.l.b16 %v510
        %v834 = vunpack.c.h.b16 %v510
        %v835 = vunpack.c.l.b16 %v511
        %v836 = vunpack.c.h.b16 %v511
        %v837 = vunpack.c.l.b16 %v512
        %v838 = vunpack.c.h.b16 %v512
        %v839 = vunpack.c.l.b16 %v513
        %v840 = vunpack.c.h.b16 %v513
        %v841 = vunpack.c.l.b16 %v514
        %v842 = vunpack.c.h.b16 %v514
        %v843 = vunpack.c.l.b16 %v515
        %v844 = vunpack.c.h.b16 %v515
        %v845 = vunpack.c.l.b16 %v516
        %v846 = vunpack.c.h.b16 %v516
        %v847 = vunpack.c.l.b16 %v517
        %v848 = vunpack.c.h.b16 %v517
        %v849 = vunpack.c.l.b16 %v518
        %v850 = vunpack.c.h.b16 %v518
        %v851 = vunpack.c.l.b16 %v519
        %v852 = vunpack.c.h.b16 %v519
        %v853 = vunpack.c.l.b16 %v520
        %v854 = vunpack.c.h.b16 %v520
        %v855 = vunpack.c.l.b16 %v521
        %v856 = vunpack.c.h.b16 %v521
        %v857 = vunpack.c.l.b16 %v522
        %v858 = vunpack.c.h.b16 %v522
        %v859 = vunpack.c.l.b16 %v523
        %v860 = vunpack.c.h.b16 %v523
        %v861 = vunpack.c.l.b16 %v524
        %v862 = vunpack.c.h.b16 %v524
        %v863 = vunpack.c.l.b16 %v525
        %v864 = vunpack.c.h.b16 %v525
        %v865 = vunpack.c.l.b16 %v526
        %v866 = vunpack.c.h.b16 %v526
        %v867 = vunpack.c.l.b16 %v527
        %v868 = vunpack.c.h.b16 %v527
        %v869 = vunpack.c.l.b16 %v528
        %v870 = vunpack.c.h.b16 %v528
        %v871 = vunpack.c.l.b16 %v529
        %v872 = vunpack.c.h.b16 %v529
        %v873 = vunpack.c.l.b16 %v530
        %v874 = vunpack.c.h.b16 %v530
        %v875 = vunpack.c.l.b16 %v531
        %v876 = vunpack.c.h.b16 %v531
        %v877 = vunpack.c.l.b16 %v532
        %v878 = vunpack.c.h.b16 %v532
        %v879 = vunpack.c.l.b16 %v533
        %v880 = vunpack.c.h.b16 %v533
        %v881 = vunpack.c.l.b16 %v534
        %v882 = vunpack.c.h.b16 %v534
        %v883 = vunpack.c.l.b16 %v535
        %v884 = vunpack.c.h.b16 %v535
        %v885 = vunpack.c.l.b16 %v536
        %v886 = vunpack.c.h.b16 %v536
        %v887 = vunpack.c.l.b16 %v537
        %v888 = vunpack.c.h.b16 %v537
        %v889 = vunpack.c.l.b16 %v538
        %v890 = vunpack.c.h.b16 %v538
        %v891 = vunpack.c.l.b16 %v539
        %v892 = vunpack.c.h.b16 %v539
        %v893 = vunpack.c.l.b16 %v540
        %v894 = vunpack.c.h.b16 %v540
        %v895 = vunpack.c.l.b16 %v541
        %v896 = vunpack.c.h.b16 %v541
        %v897 = vunpack.c.l.b16 %v542
        %v898 = vunpack.c.h.b16 %v542
        %v899 = vunpack.c.l.b16 %v543
        %v900 = vunpack.c.h.b16 %v543
        %v901 = vunpack.c.l.b16 %v544
        %v902 = vunpack.c.h.b16 %v544
        %v903 = vunpack.c.l.b16 %v545
        %v904 = vunpack.c.h.b16 %v545
        %v905 = vunpack.c.l.b16 %v546
        %v906 = vunpack.c.h.b16 %v546
        %v907 = vunpack.c.l.b16 %v547
        %v908 = vunpack.c.h.b16 %v547
        %v909 = vunpack.c.l.b16 %v548
        %v910 = vunpack.c.h.b16 %v548
        %v911 = vunpack.c.l.b16 %v549
        %v912 = vunpack.c.h.b16 %v549
        %v913 = vunpack.c.l.b16 %v550
        %v914 = vunpack.c.h.b16 %v550
        %v915 = vunpack.c.l.b16 %v551
        %v916 = vunpack.c.h.b16 %v551
        %v917 = vunpack.c.l.b16 %v552
        %v918 = vunpack.c.h.b16 %v552
        %v919 = vunpack.c.l.b16 %v553
        %v920 = vunpack.c.h.b16 %v553
        %v921 = vunpack.c.l.b16 %v554
        %v922 = vunpack.c.h.b16 %v554
        %v923 = vunpack.c.l.b16 %v555
        %v924 = vunpack.c.h.b16 %v555
        %v925 = vunpack.c.l.b16 %v556
        %v926 = vunpack.c.h.b16 %v556
        %v927 = vunpack.c.l.b16 %v557
        %v928 = vunpack.c.h.b16 %v557
        %v929 = vunpack.c.l.b16 %v558
        %v930 = vunpack.c.h.b16 %v558
        %v931 = vunpack.c.l.b16 %v559
        %v932 = vunpack.c.h.b16 %v559
        %v933 = vunpack.c.l.b16 %v560
        %v934 = vunpack.c.h.b16 %v560
        %v935 = vunpack.c.l.b16 %v561
        %v936 = vunpack.c.h.b16 %v561
        %v937 = vunpack.c.l.b16 %v562
        %v938 = vunpack.c.h.b16 %v562
        %v939 = vunpack.c.l.b16 %v563
        %v940 = vunpack.c.h.b16 %v563
        %v941 = vunpack.c.l.b16 %v564
        %v942 = vunpack.c.h.b16 %v564
        %v943 = vunpack.c.l.b16 %v565
        %v944 = vunpack.c.h.b16 %v565
        %v945 = vunpack.c.l.b16 %v566
        %v946 = vunpack.c.h.b16 %v566
        %v947 = vunpack.c.l.b16 %v567
        %v948 = vunpack.c.h.b16 %v567
        %v949 = vunpack.c.l.b16 %v568
        %v950 = vunpack.c.h.b16 %v568
        %v951 = vunpack.c.l.b16 %v569
        %v952 = vunpack.c.h.b16 %v569
        %v953 = vunpack.c.l.b16 %v570
        %v954 = vunpack.c.h.b16 %v570
        %v955 = vunpack.c.l.b16 %v571
        %v956 = vunpack.c.h.b16 %v571
        %v957 = vunpack.c.l.b16 %v572
        %v958 = vunpack.c.h.b16 %v572
        %v959 = vunpack.c.l.b16 %v573
        %v960 = vunpack.c.h.b16 %v573
        %v961 = vunpack.c.l.b16 %v574
        %v962 = vunpack.c.h.b16 %v574
        %v963 = vunpack.c.l.b16 %v575
        %v964 = vunpack.c.h.b16 %v575
        %v965 = vunpack.c.l.b16 %v576
        %v966 = vunpack.c.h.b16 %v576
        %v967 = vunpack.c.l.b16 %v577
        %v968 = vunpack.c.h.b16 %v577
        %v969 = vpack.c.b16 %v721, %v713
        %v970 = vpack.c.b16 %v722, %v714
        %v971 = vpack.c.b16 %v723, %v715
        %v972 = vpack.c.b16 %v724, %v716
        %v973 = vpack.c.b16 %v725, %v717
        %v974 = vpack.c.b16 %v726, %v718
        %v975 = vpack.c.b16 %v727, %v719
        %v976 = vpack.c.b16 %v728, %v720
        %v977 = vpack.c.b16 %v737, %v729
        %v978 = vpack.c.b16 %v738, %v730
        %v979 = vpack.c.b16 %v739, %v731
        %v980 = vpack.c.b16 %v740, %v732
        %v981 = vpack.c.b16 %v741, %v733
        %v982 = vpack.c.b16 %v742, %v734
        %v983 = vpack.c.b16 %v743, %v735
        %v984 = vpack.c.b16 %v744, %v736
        %v985 = vpack.c.b16 %v753, %v745
        %v986 = vpack.c.b16 %v754, %v746
        %v987 = vpack.c.b16 %v755, %v747
        %v988 = vpack.c.b16 %v756, %v748
        %v989 = vpack.c.b16 %v757, %v749
        %v990 = vpack.c.b16 %v758, %v750
        %v991 = vpack.c.b16 %v759, %v751
        %v992 = vpack.c.b16 %v760, %v752
        %v993 = vpack.c.b16 %v769, %v761
        %v994 = vpack.c.b16 %v770, %v762
        %v995 = vpack.c.b16 %v771, %v763
        %v996 = vpack.c.b16 %v772, %v764
        %v997 = vpack.c.b16 %v773, %v765
        %v998 = vpack.c.b16 %v774, %v766
        %v999 = vpack.c.b16 %v775, %v767
        %v1000 = vpack.c.b16 %v776, %v768
        %v1001 = vpack.c.b16 %v785, %v777
        %v1002 = vpack.c.b16 %v786, %v778
        %v1003 = vpack.c.b16 %v787, %v779
        %v1004 = vpack.c.b16 %v788, %v780
        %v1005 = vpack.c.b16 %v789, %v781
        %v1006 = vpack.c.b16 %v790, %v782
        %v1007 = vpack.c.b16 %v791, %v783
        %v1008 = vpack.c.b16 %v792, %v784
        %v1009 = vpack.c.b16 %v801, %v793
        %v1010 = vpack.c.b16 %v802, %v794
        %v1011 = vpack.c.b16 %v803, %v795
        %v1012 = vpack.c.b16 %v804, %v796
        %v1013 = vpack.c.b16 %v805, %v797
        %v1014 = vpack.c.b16 %v806, %v798
        %v1015 = vpack.c.b16 %v807, %v799
        %v1016 = vpack.c.b16 %v808, %v800
        %v1017 = vpack.c.b16 %v817, %v809
        %v1018 = vpack.c.b16 %v818, %v810
        %v1019 = vpack.c.b16 %v819, %v811
        %v1020 = vpack.c.b16 %v820, %v812
        %v1021 = vpack.c.b16 %v821, %v813
        %v1022 = vpack.c.b16 %v822, %v814
        %v1023 = vpack.c.b16 %v823, %v815
        %v1024 = vpack.c.b16 %v824, %v816
        %v1025 = vpack.c.b16 %v833, %v825
        %v1026 = vpack.c.b16 %v834, %v826
        %v1027 = vpack.c.b16 %v835, %v827
        %v1028 = vpack.c.b16 %v836, %v828
        %v1029 = vpack.c.b16 %v837, %v829
        %v1030 = vpack.c.b16 %v838, %v830
        %v1031 = vpack.c.b16 %v839, %v831
        %v1032 = vpack.c.b16 %v840, %v832
        %v1033 = vpack.c.b16 %v849, %v841
        %v1034 = vpack.c.b16 %v850, %v842
        %v1035 = vpack.c.b16 %v851, %v843
        %v1036 = vpack.c.b16 %v852, %v844
        %v1037 = vpack.c.b16 %v853, %v845
        %v1038 = vpack.c.b16 %v854, %v846
        %v1039 = vpack.c.b16 %v855, %v847
        %v1040 = vpack.c.b16 %v856, %v848
        %v1041 = vpack.c.b16 %v865, %v857
        %v1042 = vpack.c.b16 %v866, %v858
        %v1043 = vpack.c.b16 %v867, %v859
        %v1044 = vpack.c.b16 %v868, %v860
        %v1045 = vpack.c.b16 %v869, %v861
        %v1046 = vpack.c.b16 %v870, %v862
        %v1047 = vpack.c.b16 %v871, %v863
        %v1048 = vpack.c.b16 %v872, %v864
        %v1049 = vpack.c.b16 %v881, %v873
        %v1050 = vpack.c.b16 %v882, %v874
        %v1051 = vpack.c.b16 %v883, %v875
        %v1052 = vpack.c.b16 %v884, %v876
        %v1053 = vpack.c.b16 %v885, %v877
        %v1054 = vpack.c.b16 %v886, %v878
        %v1055 = vpack.c.b16 %v887, %v879
        %v1056 = vpack.c.b16 %v888, %v880
        %v1057 = vpack.c.b16 %v897, %v889
        %v1058 = vpack.c.b16 %v898, %v890
        %v1059 = vpack.c.b16 %v899, %v891
        %v1060 = vpack.c.b16 %v900, %v892
        %v1061 = vpack.c.b16 %v901, %v893
        %v1062 = vpack.c.b16 %v902, %v894
        %v1063 = vpack.c.b16 %v903, %v895
        %v1064 = vpack.c.b16 %v904, %v896
        %v1065 = vpack.c.b16 %v913, %v905
        %v1066 = vpack.c.b16 %v914, %v906
        %v1067 = vpack.c.b16 %v915, %v907
        %v1068 = vpack.c.b16 %v916, %v908
        %v1069 = vpack.c.b16 %v917, %v909
        %v1070 = vpack.c.b16 %v918, %v910
        %v1071 = vpack.c.b16 %v919, %v911
        %v1072 = vpack.c.b16 %v920, %v912
        %v1073 = vpack.c.b16 %v929, %v921
        %v1074 = vpack.c.b16 %v930, %v922
        %v1075 = vpack.c.b16 %v931, %v923
        %v1076 = vpack.c.b16 %v932, %v924
        %v1077 = vpack.c.b16 %v933, %v925
        %v1078 = vpack.c.b16 %v934, %v926
        %v1079 = vpack.c.b16 %v935, %v927
        %v1080 = vpack.c.b16 %v936, %v928
        %v1081 = vpack.c.b16 %v945, %v937
        %v1082 = vpack.c.b16 %v946, %v938
        %v1083 = vpack.c.b16 %v947, %v939
        %v1084 = vpack.c.b16 %v948, %v940
        %v1085 = vpack.c.b16 %v949, %v941
        %v1086 = vpack.c.b16 %v950, %v942
        %v1087 = vpack.c.b16 %v951, %v943
        %v1088 = vpack.c.b16 %v952, %v944
        %v1089 = vpack.c.b16 %v961, %v953
        %v1090 = vpack.c.b16 %v962, %v954
        %v1091 = vpack.c.b16 %v963, %v955
        %v1092 = vpack.c.b16 %v964, %v956
        %v1093 = vpack.c.b16 %v965, %v957
        %v1094 = vpack.c.b16 %v966, %v958
        %v1095 = vpack.c.b16 %v967, %v959
        %v1096 = vpack.c.b16 %v968, %v960
        %1225 = vmatprep.subr.bf16.mxu0 %v970
        %1226 = vmatpush1.bf16.msra.mxu0 %v969
        %1227 = vmatprep.subr.bf16.mxu0 %v978
        %1228 = vmatpush1.bf16.msra.mxu0 %v977
        %1229 = vmatprep.subr.bf16.mxu0 %v986
        %1230 = vmatpush1.bf16.msra.mxu0 %v985
        %1231 = vmatprep.subr.bf16.mxu0 %v994
        %1232 = vmatpush1.bf16.msra.mxu0 %v993
        %1233 = vmatprep.subr.bf16.mxu0 %v1002
        %1234 = vmatpush1.bf16.msra.mxu0 %v1001
        %1235 = vmatprep.subr.bf16.mxu0 %v1010
        %1236 = vmatpush1.bf16.msra.mxu0 %v1009
        %1237 = vmatprep.subr.bf16.mxu0 %v1018
        %1238 = vmatpush1.bf16.msra.mxu0 %v1017
        %1239 = vmatprep.subr.bf16.mxu0 %v1026
        %1240 = vmatpush1.bf16.msra.mxu0 %v1025
        %1241 = vmatprep.subr.bf16.mxu0 %v1034
        %1242 = vmatpush1.bf16.msra.mxu0 %v1033
        %1243 = vmatprep.subr.bf16.mxu0 %v1042
        %1244 = vmatpush1.bf16.msra.mxu0 %v1041
        %1245 = vmatprep.subr.bf16.mxu0 %v1050
        %1246 = vmatpush1.bf16.msra.mxu0 %v1049
        %1247 = vmatprep.subr.bf16.mxu0 %v1058
        %1248 = vmatpush1.bf16.msra.mxu0 %v1057
        %1249 = vmatprep.subr.bf16.mxu0 %v1066
        %1250 = vmatpush1.bf16.msra.mxu0 %v1065
        %1251 = vmatprep.subr.bf16.mxu0 %v1074
        %1252 = vmatpush1.bf16.msra.mxu0 %v1073
        %1253 = vmatprep.subr.bf16.mxu0 %v1082
        %1254 = vmatpush1.bf16.msra.mxu0 %v1081
        %1255 = vmatprep.subr.bf16.mxu0 %v1090
        %1256 = vmatpush1.bf16.msra.mxu0 %v1089
        %1257 = vmatprep.mubr.bf16.mxu0 %v582
        %1258 = vmatmul.mubr.bf16.gmra.mrb[0].mxu0 %v581
        %v1259 = vpop.f32.mrb[0].mxu0
        %v1260 = vadd.f32 0.0, %v1259
        %v1261 = vpop.f32.mrb[0].mxu0
        %v1262 = vadd.f32 0.0, %v1261
        %v1263 = vpop.f32.mrb[0].mxu0
        %v1264 = vpop.f32.mrb[0].mxu0
        %1265 = vdwg.mxu0
        %1266 = vmatprep.subr.bf16.mxu0 %v972
        %1267 = vmatpush1.bf16.msra.mxu0 %v971
        %1268 = vmatprep.subr.bf16.mxu0 %v980
        %1269 = vmatpush1.bf16.msra.mxu0 %v979
        %1270 = vmatprep.subr.bf16.mxu0 %v988
        %1271 = vmatpush1.bf16.msra.mxu0 %v987
        %1272 = vmatprep.subr.bf16.mxu0 %v996
        %1273 = vmatpush1.bf16.msra.mxu0 %v995
        %1274 = vmatprep.subr.bf16.mxu0 %v1004
        %1275 = vmatpush1.bf16.msra.mxu0 %v1003
        %1276 = vmatprep.subr.bf16.mxu0 %v1012
        %1277 = vmatpush1.bf16.msra.mxu0 %v1011
        %1278 = vmatprep.subr.bf16.mxu0 %v1020
        %1279 = vmatpush1.bf16.msra.mxu0 %v1019
        %1280 = vmatprep.subr.bf16.mxu0 %v1028
        %1281 = vmatpush1.bf16.msra.mxu0 %v1027
        %1282 = vmatprep.subr.bf16.mxu0 %v1036
        %1283 = vmatpush1.bf16.msra.mxu0 %v1035
        %1284 = vmatprep.subr.bf16.mxu0 %v1044
        %1285 = vmatpush1.bf16.msra.mxu0 %v1043
        %1286 = vmatprep.subr.bf16.mxu0 %v1052
        %1287 = vmatpush1.bf16.msra.mxu0 %v1051
        %1288 = vmatprep.subr.bf16.mxu0 %v1060
        %1289 = vmatpush1.bf16.msra.mxu0 %v1059
        %1290 = vmatprep.subr.bf16.mxu0 %v1068
        %1291 = vmatpush1.bf16.msra.mxu0 %v1067
        %1292 = vmatprep.subr.bf16.mxu0 %v1076
        %1293 = vmatpush1.bf16.msra.mxu0 %v1075
        %1294 = vmatprep.subr.bf16.mxu0 %v1084
        %1295 = vmatpush1.bf16.msra.mxu0 %v1083
        %1296 = vmatprep.subr.bf16.mxu0 %v1092
        %1297 = vmatpush1.bf16.msra.mxu0 %v1091
        %1298 = vmatprep.mubr.bf16.mxu0 %v582
        %1299 = vmatmul.mubr.bf16.gmra.mrb[0].mxu0 %v581
        %v1300 = vpop.f32.mrb[0].mxu0
        %v1301 = vadd.f32 0.0, %v1300
        %v1302 = vpop.f32.mrb[0].mxu0
        %v1303 = vadd.f32 0.0, %v1302
        %v1304 = vpop.f32.mrb[0].mxu0
        %v1305 = vpop.f32.mrb[0].mxu0
        %1306 = vdwg.mxu0
        %1307 = vmatprep.subr.bf16.mxu0 %v974
        %1308 = vmatpush1.bf16.msra.mxu0 %v973
        %1309 = vmatprep.subr.bf16.mxu0 %v982
        %1310 = vmatpush1.bf16.msra.mxu0 %v981
        %1311 = vmatprep.subr.bf16.mxu0 %v990
        %1312 = vmatpush1.bf16.msra.mxu0 %v989
        %1313 = vmatprep.subr.bf16.mxu0 %v998
        %1314 = vmatpush1.bf16.msra.mxu0 %v997
        %1315 = vmatprep.subr.bf16.mxu0 %v1006
        %1316 = vmatpush1.bf16.msra.mxu0 %v1005
        %1317 = vmatprep.subr.bf16.mxu0 %v1014
        %1318 = vmatpush1.bf16.msra.mxu0 %v1013
        %1319 = vmatprep.subr.bf16.mxu0 %v1022
        %1320 = vmatpush1.bf16.msra.mxu0 %v1021
        %1321 = vmatprep.subr.bf16.mxu0 %v1030
        %1322 = vmatpush1.bf16.msra.mxu0 %v1029
        %1323 = vmatprep.subr.bf16.mxu0 %v1038
        %1324 = vmatpush1.bf16.msra.mxu0 %v1037
        %1325 = vmatprep.subr.bf16.mxu0 %v1046
        %1326 = vmatpush1.bf16.msra.mxu0 %v1045
        %1327 = vmatprep.subr.bf16.mxu0 %v1054
        %1328 = vmatpush1.bf16.msra.mxu0 %v1053
        %1329 = vmatprep.subr.bf16.mxu0 %v1062
        %1330 = vmatpush1.bf16.msra.mxu0 %v1061
        %1331 = vmatprep.subr.bf16.mxu0 %v1070
        %1332 = vmatpush1.bf16.msra.mxu0 %v1069
        %1333 = vmatprep.subr.bf16.mxu0 %v1078
        %1334 = vmatpush1.bf16.msra.mxu0 %v1077
        %1335 = vmatprep.subr.bf16.mxu0 %v1086
        %1336 = vmatpush1.bf16.msra.mxu0 %v1085
        %1337 = vmatprep.subr.bf16.mxu0 %v1094
        %1338 = vmatpush1.bf16.msra.mxu0 %v1093
        %1339 = vmatprep.mubr.bf16.mxu0 %v582
        %1340 = vmatmul.mubr.bf16.gmra.mrb[0].mxu0 %v581
        %v1341 = vpop.f32.mrb[0].mxu0
        %v1342 = vadd.f32 0.0, %v1341
        %v1343 = vpop.f32.mrb[0].mxu0
        %v1344 = vadd.f32 0.0, %v1343
        %v1345 = vpop.f32.mrb[0].mxu0
        %v1346 = vpop.f32.mrb[0].mxu0
        %1347 = vdwg.mxu0
        %1348 = vmatprep.subr.bf16.mxu0 %v976
        %1349 = vmatpush1.bf16.msra.mxu0 %v975
        %1350 = vmatprep.subr.bf16.mxu0 %v984
        %1351 = vmatpush1.bf16.msra.mxu0 %v983
        %1352 = vmatprep.subr.bf16.mxu0 %v992
        %1353 = vmatpush1.bf16.msra.mxu0 %v991
        %1354 = vmatprep.subr.bf16.mxu0 %v1000
        %1355 = vmatpush1.bf16.msra.mxu0 %v999
        %1356 = vmatprep.subr.bf16.mxu0 %v1008
        %1357 = vmatpush1.bf16.msra.mxu0 %v1007
        %1358 = vmatprep.subr.bf16.mxu0 %v1016
        %1359 = vmatpush1.bf16.msra.mxu0 %v1015
        %1360 = vmatprep.subr.bf16.mxu0 %v1024
        %1361 = vmatpush1.bf16.msra.mxu0 %v1023
        %1362 = vmatprep.subr.bf16.mxu0 %v1032
        %1363 = vmatpush1.bf16.msra.mxu0 %v1031
        %1364 = vmatprep.subr.bf16.mxu0 %v1040
        %1365 = vmatpush1.bf16.msra.mxu0 %v1039
        %1366 = vmatprep.subr.bf16.mxu0 %v1048
        %1367 = vmatpush1.bf16.msra.mxu0 %v1047
        %1368 = vmatprep.subr.bf16.mxu0 %v1056
        %1369 = vmatpush1.bf16.msra.mxu0 %v1055
        %1370 = vmatprep.subr.bf16.mxu0 %v1064
        %1371 = vmatpush1.bf16.msra.mxu0 %v1063
        %1372 = vmatprep.subr.bf16.mxu0 %v1072
        %1373 = vmatpush1.bf16.msra.mxu0 %v1071
        %1374 = vmatprep.subr.bf16.mxu0 %v1080
        %1375 = vmatpush1.bf16.msra.mxu0 %v1079
        %1376 = vmatprep.subr.bf16.mxu0 %v1088
        %1377 = vmatpush1.bf16.msra.mxu0 %v1087
        %1378 = vmatprep.subr.bf16.mxu0 %v1096
        %1379 = vmatpush1.bf16.msra.mxu0 %v1095
        %1380 = vmatprep.mubr.bf16.mxu0 %v582
        %1381 = vmatmul.mubr.bf16.gmra.mrb[0].mxu0 %v581
        %v1382 = vpop.f32.mrb[0].mxu0
        %v1383 = vadd.f32 0.0, %v1382
        %v1384 = vpop.f32.mrb[0].mxu0
        %v1385 = vadd.f32 0.0, %v1384
        %v1386 = vpop.f32.mrb[0].mxu0
        %v1387 = vpop.f32.mrb[0].mxu0
        %1388 = vdwg.mxu0
        %v1389 = vadd.f32 %v441, %v1260
        %v1390 = vadd.f32 %v442, %v1262
        %v1391 = vadd.f32 %v443, %v1301
        %v1392 = vadd.f32 %v444, %v1303
        %v1393 = vadd.f32 %v445, %v1342
        %v1394 = vadd.f32 %v446, %v1344
        %v1395 = vadd.f32 %v447, %v1383
        %v1396 = vadd.f32 %v448, %v1385
        %1397 = vst [vmem:[#allocation2] sm:$0xff] %v1389
        %1398 = vst [vmem:[#allocation2 + $0x8] sm:$0xff] %v1390
        %1399 = vst [vmem:[#allocation2 + $0x10] sm:$0xff] %v1391
        %1400 = vst [vmem:[#allocation2 + $0x18] sm:$0xff] %v1392
        %1401 = vst [vmem:[#allocation2 + $0x20] sm:$0xff] %v1393
        %1402 = vst [vmem:[#allocation2 + $0x28] sm:$0xff] %v1394
        %1403 = vst [vmem:[#allocation2 + $0x30] sm:$0xff] %v1395
        %1404 = vst [vmem:[#allocation2 + $0x38] sm:$0xff] %v1396
        // Predicated region
        $region61: #{paired_smile_forward.1} parent=47 // pred_check
          %p1405 = pneg %p429
        $region62: #{paired_smile_forward.1} parent=47 // pred_check_branch
          %1407 = sbr.rel (%p1405) target = $region64
        $region63: #{paired_smile_forward.1} parent=47 // pred_region
          %v1408 = vld [vmem:[#allocation2] sm:$0xff]
          %v1409 = vld [vmem:[#allocation2 + $0x8] sm:$0xff]
          %v1410 = vld [vmem:[#allocation2 + $0x10] sm:$0xff]
          %v1411 = vld [vmem:[#allocation2 + $0x18] sm:$0xff]
          %v1412 = vld [vmem:[#allocation2 + $0x20] sm:$0xff]
          %v1413 = vld [vmem:[#allocation2 + $0x28] sm:$0xff]
          %v1414 = vld [vmem:[#allocation2 + $0x30] sm:$0xff]
          %v1415 = vld [vmem:[#allocation2 + $0x38] sm:$0xff]
          %v1416 = vld [vmem:[%s419] sm:$0xff]
          %v1417 = vld [vmem:[%s419 + $0x8] sm:$0xff]
          %v1418 = vrot.slane %v1408, 4
          %v1419 = vadd.f32 %v1408, %v1418
          %v1420 = vrot.slane %v1419, 2
          %v1421 = vadd.f32 %v1419, %v1420
          %v1422 = vrot.slane %v1421, 1
          %v1423 = vadd.f32 %v1421, %v1422
          %v1424 = vrot.slane %v1409, 4
          %v1425 = vadd.f32 %v1409, %v1424
          %v1426 = vrot.slane %v1425, 2
          %v1427 = vadd.f32 %v1425, %v1426
          %v1428 = vrot.slane %v1427, 1
          %v1429 = vadd.f32 %v1427, %v1428
          %v1430 = vrot.slane %v1410, 4
          %v1431 = vadd.f32 %v1410, %v1430
          %v1432 = vrot.slane %v1431, 2
          %v1433 = vadd.f32 %v1431, %v1432
          %v1434 = vrot.slane %v1433, 1
          %v1435 = vadd.f32 %v1433, %v1434
          %v1436 = vrot.slane %v1411, 4
          %v1437 = vadd.f32 %v1411, %v1436
          %v1438 = vrot.slane %v1437, 2
          %v1439 = vadd.f32 %v1437, %v1438
          %v1440 = vrot.slane %v1439, 1
          %v1441 = vadd.f32 %v1439, %v1440
          %v1442 = vrot.slane %v1412, 4
          %v1443 = vadd.f32 %v1412, %v1442
          %v1444 = vrot.slane %v1443, 2
          %v1445 = vadd.f32 %v1443, %v1444
          %v1446 = vrot.slane %v1445, 1
          %v1447 = vadd.f32 %v1445, %v1446
          %v1448 = vrot.slane %v1413, 4
          %v1449 = vadd.f32 %v1413, %v1448
          %v1450 = vrot.slane %v1449, 2
          %v1451 = vadd.f32 %v1449, %v1450
          %v1452 = vrot.slane %v1451, 1
          %v1453 = vadd.f32 %v1451, %v1452
          %v1454 = vrot.slane %v1414, 4
          %v1455 = vadd.f32 %v1414, %v1454
          %v1456 = vrot.slane %v1455, 2
          %v1457 = vadd.f32 %v1455, %v1456
          %v1458 = vrot.slane %v1457, 1
          %v1459 = vadd.f32 %v1457, %v1458
          %v1460 = vrot.slane %v1415, 4
          %v1461 = vadd.f32 %v1415, %v1460
          %v1462 = vrot.slane %v1461, 2
          %v1463 = vadd.f32 %v1461, %v1462
          %v1464 = vrot.slane %v1463, 1
          %v1465 = vadd.f32 %v1463, %v1464
          %v1466 = vrcp.pop 8.0
          %v1467 = vmul.f32 %v1423, %v1466
          %v1468 = vmul.f32 %v1429, %v1466
          %v1469 = vmul.f32 %v1435, %v1466
          %v1470 = vmul.f32 %v1441, %v1466
          %v1471 = vmul.f32 %v1447, %v1466
          %v1472 = vmul.f32 %v1453, %v1466
          %v1473 = vmul.f32 %v1459, %v1466
          %v1474 = vmul.f32 %v1465, %v1466
          %v1475 = vsub.f32 %v1408, %v1467
          %v1476 = vsub.f32 %v1409, %v1468
          %v1477 = vsub.f32 %v1410, %v1469
          %v1478 = vsub.f32 %v1411, %v1470
          %v1479 = vsub.f32 %v1412, %v1471
          %v1480 = vsub.f32 %v1413, %v1472
          %v1481 = vsub.f32 %v1414, %v1473
          %v1482 = vsub.f32 %v1415, %v1474
          %v1483 = vmul.f32 %v1475, %v1475
          %v1484 = vmul.f32 %v1476, %v1476
          %v1485 = vmul.f32 %v1477, %v1477
          %v1486 = vmul.f32 %v1478, %v1478
          %v1487 = vmul.f32 %v1479, %v1479
          %v1488 = vmul.f32 %v1480, %v1480
          %v1489 = vmul.f32 %v1481, %v1481
          %v1490 = vmul.f32 %v1482, %v1482
          %v1491 = vrot.slane %v1483, 4
          %v1492 = vadd.f32 %v1483, %v1491
          %v1493 = vrot.slane %v1492, 2
          %v1494 = vadd.f32 %v1492, %v1493
          %v1495 = vrot.slane %v1494, 1
          %v1496 = vadd.f32 %v1494, %v1495
          %v1497 = vrot.slane %v1484, 4
          %v1498 = vadd.f32 %v1484, %v1497
          %v1499 = vrot.slane %v1498, 2
          %v1500 = vadd.f32 %v1498, %v1499
          %v1501 = vrot.slane %v1500, 1
          %v1502 = vadd.f32 %v1500, %v1501
          %v1503 = vrot.slane %v1485, 4
          %v1504 = vadd.f32 %v1485, %v1503
          %v1505 = vrot.slane %v1504, 2
          %v1506 = vadd.f32 %v1504, %v1505
          %v1507 = vrot.slane %v1506, 1
          %v1508 = vadd.f32 %v1506, %v1507
          %v1509 = vrot.slane %v1486, 4
          %v1510 = vadd.f32 %v1486, %v1509
          %v1511 = vrot.slane %v1510, 2
          %v1512 = vadd.f32 %v1510, %v1511
          %v1513 = vrot.slane %v1512, 1
          %v1514 = vadd.f32 %v1512, %v1513
          %v1515 = vrot.slane %v1487, 4
          %v1516 = vadd.f32 %v1487, %v1515
          %v1517 = vrot.slane %v1516, 2
          %v1518 = vadd.f32 %v1516, %v1517
          %v1519 = vrot.slane %v1518, 1
          %v1520 = vadd.f32 %v1518, %v1519
          %v1521 = vrot.slane %v1488, 4
          %v1522 = vadd.f32 %v1488, %v1521
          %v1523 = vrot.slane %v1522, 2
          %v1524 = vadd.f32 %v1522, %v1523
          %v1525 = vrot.slane %v1524, 1
          %v1526 = vadd.f32 %v1524, %v1525
          %v1527 = vrot.slane %v1489, 4
          %v1528 = vadd.f32 %v1489, %v1527
          %v1529 = vrot.slane %v1528, 2
          %v1530 = vadd.f32 %v1528, %v1529
          %v1531 = vrot.slane %v1530, 1
          %v1532 = vadd.f32 %v1530, %v1531
          %v1533 = vrot.slane %v1490, 4
          %v1534 = vadd.f32 %v1490, %v1533
          %v1535 = vrot.slane %v1534, 2
          %v1536 = vadd.f32 %v1534, %v1535
          %v1537 = vrot.slane %v1536, 1
          %v1538 = vadd.f32 %v1536, %v1537
          %v1539 = vmul.f32 %v1496, %v1466
          %v1540 = vmul.f32 %v1502, %v1466
          %v1541 = vmul.f32 %v1508, %v1466
          %v1542 = vmul.f32 %v1514, %v1466
          %v1543 = vmul.f32 %v1520, %v1466
          %v1544 = vmul.f32 %v1526, %v1466
          %v1545 = vmul.f32 %v1532, %v1466
          %v1546 = vmul.f32 %v1538, %v1466
          %v1547 = vadd.f32 %v1539, 1e-05
          %v1548 = vadd.f32 %v1540, 1e-05
          %v1549 = vadd.f32 %v1541, 1e-05
          %v1550 = vadd.f32 %v1542, 1e-05
          %v1551 = vadd.f32 %v1543, 1e-05
          %v1552 = vadd.f32 %v1544, 1e-05
          %v1553 = vadd.f32 %v1545, 1e-05
          %v1554 = vadd.f32 %v1546, 1e-05
          %v1555 = vrsqrt.pop %v1547
          %v1556 = vrsqrt.pop %v1548
          %v1557 = vrsqrt.pop %v1549
          %v1558 = vrsqrt.pop %v1550
          %v1559 = vrsqrt.pop %v1551
          %v1560 = vrsqrt.pop %v1552
          %v1561 = vrsqrt.pop %v1553
          %v1562 = vrsqrt.pop %v1554
          %v1571 = vcombine.low %v1555, %v1556
          %v1572 = vcombine.low %v1557, %v1558
          %v1574 = vunpack.c.l.s4 1983009808
          %v1575 = vunpack.c.0.s8 %v1574
          %v1576 = vlaneseq
          %v1577 = vshrl.u32 %v1576, 7
          %v1578 = vsub.s32 %v1575, %v1577
          %v1579 = vrot.slane %v1571, %v1578
          %v1581 = vunpack.c.l.s4 1983009808
          %v1582 = vunpack.c.0.s8 %v1581
          %v1583 = vlaneseq
          %v1584 = vshrl.u32 %v1583, 7
          %v1585 = vsub.s32 %v1582, %v1584
          %v1586 = vrot.slane %v1572, %v1585
          %v1587 = vcombine.low %v1579, %v1586
          %v1588 = vcombine.low %v1559, %v1560
          %v1589 = vcombine.low %v1561, %v1562
          %v1591 = vunpack.c.l.s4 1983009808
          %v1592 = vunpack.c.0.s8 %v1591
          %v1593 = vlaneseq
          %v1594 = vshrl.u32 %v1593, 7
          %v1595 = vsub.s32 %v1592, %v1594
          %v1596 = vrot.slane %v1588, %v1595
          %v1598 = vunpack.c.l.s4 1983009808
          %v1599 = vunpack.c.0.s8 %v1598
          %v1600 = vlaneseq
          %v1601 = vshrl.u32 %v1600, 7
          %v1602 = vsub.s32 %v1599, %v1601
          %v1603 = vrot.slane %v1589, %v1602
          %v1604 = vcombine.low %v1596, %v1603
          %v1607 = vmul.f32 %v1416, %v1587
          %v1608 = vmul.f32 %v1417, %v1604
          %v1611 = vlaneseq
          %v1612 = vshrl.u32 %v1611, 7
          %v1613 = vsub.s32 0, %v1612
          %v1614 = vrot.slane %v1607, %v1613
          %v1615 = vlaneseq
          %v1616 = vshrl.u32 %v1615, 7
          %v1617 = vsub.s32 2, %v1616
          %v1618 = vrot.slane %v1607, %v1617
          %v1619 = vlaneseq
          %v1620 = vshrl.u32 %v1619, 7
          %v1621 = vsub.s32 4, %v1620
          %v1622 = vrot.slane %v1607, %v1621
          %v1623 = vlaneseq
          %v1624 = vshrl.u32 %v1623, 7
          %v1625 = vsub.s32 6, %v1624
          %v1626 = vrot.slane %v1607, %v1625
          %v1627 = vlaneseq
          %v1628 = vshrl.u32 %v1627, 7
          %v1629 = vsub.s32 0, %v1628
          %v1630 = vrot.slane %v1608, %v1629
          %v1631 = vlaneseq
          %v1632 = vshrl.u32 %v1631, 7
          %v1633 = vsub.s32 2, %v1632
          %v1634 = vrot.slane %v1608, %v1633
          %v1635 = vlaneseq
          %v1636 = vshrl.u32 %v1635, 7
          %v1637 = vsub.s32 4, %v1636
          %v1638 = vrot.slane %v1608, %v1637
          %v1639 = vlaneseq
          %v1640 = vshrl.u32 %v1639, 7
          %v1641 = vsub.s32 6, %v1640
          %v1642 = vrot.slane %v1608, %v1641
          %v1651 = vmul.f32 %v1467, %v1614
          %v1652 = vmul.f32 %v1468, %v1618
          %v1653 = vmul.f32 %v1469, %v1622
          %v1654 = vmul.f32 %v1470, %v1626
          %v1655 = vmul.f32 %v1471, %v1630
          %v1656 = vmul.f32 %v1472, %v1634
          %v1657 = vmul.f32 %v1473, %v1638
          %v1658 = vmul.f32 %v1474, %v1642
          %v1667 = vcombine.low %v1651, %v1652
          %v1668 = vcombine.low %v1653, %v1654
          %v1670 = vunpack.c.l.s4 1983009808
          %v1671 = vunpack.c.0.s8 %v1670
          %v1672 = vlaneseq
          %v1673 = vshrl.u32 %v1672, 7
          %v1674 = vsub.s32 %v1671, %v1673
          %v1675 = vrot.slane %v1667, %v1674
          %v1677 = vunpack.c.l.s4 1983009808
          %v1678 = vunpack.c.0.s8 %v1677
          %v1679 = vlaneseq
          %v1680 = vshrl.u32 %v1679, 7
          %v1681 = vsub.s32 %v1678, %v1680
          %v1682 = vrot.slane %v1668, %v1681
          %v1683 = vcombine.low %v1675, %v1682
          %v1684 = vcombine.low %v1655, %v1656
          %v1685 = vcombine.low %v1657, %v1658
          %v1687 = vunpack.c.l.s4 1983009808
          %v1688 = vunpack.c.0.s8 %v1687
          %v1689 = vlaneseq
          %v1690 = vshrl.u32 %v1689, 7
          %v1691 = vsub.s32 %v1688, %v1690
          %v1692 = vrot.slane %v1684, %v1691
          %v1694 = vunpack.c.l.s4 1983009808
          %v1695 = vunpack.c.0.s8 %v1694
          %v1696 = vlaneseq
          %v1697 = vshrl.u32 %v1696, 7
          %v1698 = vsub.s32 %v1695, %v1697
          %v1699 = vrot.slane %v1685, %v1698
          %v1700 = vcombine.low %v1692, %v1699
          %v1701 = vrot.slane %v1683, 7
          %v1702 = vrot.slane %v1700, 7
          %v1705 = vsub.f32 %v1416, %v1701
          %v1706 = vsub.f32 %v1417, %v1702
          %v1707 = vlaneseq
          %v1708 = vshrl.u32 %v1707, 7
          %v1709 = vsub.s32 0, %v1708
          %v1710 = vrot.slane %v1614, %v1709
          %v1711 = vlaneseq
          %v1712 = vshrl.u32 %v1711, 7
          %v1713 = vsub.s32 0, %v1712
          %v1714 = vrot.slane %v1618, %v1713
          %v1715 = vlaneseq
          %v1716 = vshrl.u32 %v1715, 7
          %v1717 = vsub.s32 0, %v1716
          %v1718 = vrot.slane %v1622, %v1717
          %v1719 = vlaneseq
          %v1720 = vshrl.u32 %v1719, 7
          %v1721 = vsub.s32 0, %v1720
          %v1722 = vrot.slane %v1626, %v1721
          %v1723 = vlaneseq
          %v1724 = vshrl.u32 %v1723, 7
          %v1725 = vsub.s32 0, %v1724
          %v1726 = vrot.slane %v1630, %v1725
          %v1727 = vlaneseq
          %v1728 = vshrl.u32 %v1727, 7
          %v1729 = vsub.s32 0, %v1728
          %v1730 = vrot.slane %v1634, %v1729
          %v1731 = vlaneseq
          %v1732 = vshrl.u32 %v1731, 7
          %v1733 = vsub.s32 0, %v1732
          %v1734 = vrot.slane %v1638, %v1733
          %v1735 = vlaneseq
          %v1736 = vshrl.u32 %v1735, 7
          %v1737 = vsub.s32 0, %v1736
          %v1738 = vrot.slane %v1642, %v1737
          %v1739 = vmul.f32 %v1408, %v1710
          %v1740 = vmul.f32 %v1409, %v1714
          %v1741 = vmul.f32 %v1410, %v1718
          %v1742 = vmul.f32 %v1411, %v1722
          %v1743 = vmul.f32 %v1412, %v1726
          %v1744 = vmul.f32 %v1413, %v1730
          %v1745 = vmul.f32 %v1414, %v1734
          %v1746 = vmul.f32 %v1415, %v1738
          %v1749 = vlaneseq
          %v1750 = vshrl.u32 %v1749, 7
          %v1751 = vsub.s32 1, %v1750
          %v1752 = vrot.slane %v1705, %v1751
          %v1753 = vlaneseq
          %v1754 = vshrl.u32 %v1753, 7
          %v1755 = vsub.s32 3, %v1754
          %v1756 = vrot.slane %v1705, %v1755
          %v1757 = vlaneseq
          %v1758 = vshrl.u32 %v1757, 7
          %v1759 = vsub.s32 5, %v1758
          %v1760 = vrot.slane %v1705, %v1759
          %v1761 = vlaneseq
          %v1762 = vshrl.u32 %v1761, 7
          %v1763 = vsub.s32 7, %v1762
          %v1764 = vrot.slane %v1705, %v1763
          %v1765 = vlaneseq
          %v1766 = vshrl.u32 %v1765, 7
          %v1767 = vsub.s32 1, %v1766
          %v1768 = vrot.slane %v1706, %v1767
          %v1769 = vlaneseq
          %v1770 = vshrl.u32 %v1769, 7
          %v1771 = vsub.s32 3, %v1770
          %v1772 = vrot.slane %v1706, %v1771
          %v1773 = vlaneseq
          %v1774 = vshrl.u32 %v1773, 7
          %v1775 = vsub.s32 5, %v1774
          %v1776 = vrot.slane %v1706, %v1775
          %v1777 = vlaneseq
          %v1778 = vshrl.u32 %v1777, 7
          %v1779 = vsub.s32 7, %v1778
          %v1780 = vrot.slane %v1706, %v1779
          %v1789 = vlaneseq
          %v1790 = vshrl.u32 %v1789, 7
          %v1791 = vsub.s32 1, %v1790
          %v1792 = vrot.slane %v1752, %v1791
          %v1793 = vlaneseq
          %v1794 = vshrl.u32 %v1793, 7
          %v1795 = vsub.s32 1, %v1794
          %v1796 = vrot.slane %v1756, %v1795
          %v1797 = vlaneseq
          %v1798 = vshrl.u32 %v1797, 7
          %v1799 = vsub.s32 1, %v1798
          %v1800 = vrot.slane %v1760, %v1799
          %v1801 = vlaneseq
          %v1802 = vshrl.u32 %v1801, 7
          %v1803 = vsub.s32 1, %v1802
          %v1804 = vrot.slane %v1764, %v1803
          %v1805 = vlaneseq
          %v1806 = vshrl.u32 %v1805, 7
          %v1807 = vsub.s32 1, %v1806
          %v1808 = vrot.slane %v1768, %v1807
          %v1809 = vlaneseq
          %v1810 = vshrl.u32 %v1809, 7
          %v1811 = vsub.s32 1, %v1810
          %v1812 = vrot.slane %v1772, %v1811
          %v1813 = vlaneseq
          %v1814 = vshrl.u32 %v1813, 7
          %v1815 = vsub.s32 1, %v1814
          %v1816 = vrot.slane %v1776, %v1815
          %v1817 = vlaneseq
          %v1818 = vshrl.u32 %v1817, 7
          %v1819 = vsub.s32 1, %v1818
          %v1820 = vrot.slane %v1780, %v1819
          %v1821 = vadd.f32 %v1739, %v1792
          %v1822 = vadd.f32 %v1740, %v1796
          %v1823 = vadd.f32 %v1741, %v1800
          %v1824 = vadd.f32 %v1742, %v1804
          %v1825 = vadd.f32 %v1743, %v1808
          %v1826 = vadd.f32 %v1744, %v1812
          %v1827 = vadd.f32 %v1745, %v1816
          %v1828 = vadd.f32 %v1746, %v1820
          %v1829 = vmax.f32 %v1821, 0.0
          %v1830 = vmax.f32 %v1822, 0.0
          %v1831 = vmax.f32 %v1823, 0.0
          %v1832 = vmax.f32 %v1824, 0.0
          %v1833 = vmax.f32 %v1825, 0.0
          %v1834 = vmax.f32 %v1826, 0.0
          %v1835 = vmax.f32 %v1827, 0.0
          %v1836 = vmax.f32 %v1828, 0.0
          %v1837 = vpack.c.bf16 %v1829, %v1829
          %v1838 = vpack.c.bf16 %v1830, %v1830
          %v1839 = vpack.c.bf16 %v1831, %v1831
          %v1840 = vpack.c.bf16 %v1832, %v1832
          %v1841 = vpack.c.bf16 %v1833, %v1833
          %v1842 = vpack.c.bf16 %v1834, %v1834
          %v1843 = vpack.c.bf16 %v1835, %v1835
          %v1844 = vpack.c.bf16 %v1836, %v1836
          %v1845 = vld [vmem:[%s351] sm:$0xf]
          %v1846 = vld [vmem:[%s351 + $0x4] sm:$0xf]
          %v1847 = vld [vmem:[%s351 + $0x8] sm:$0xf]
          %v1848 = vld [vmem:[%s351 + $0xc] sm:$0xf]
          %v1849 = vld [vmem:[%s351 + $0x10] sm:$0xf]
          %v1850 = vld [vmem:[%s351 + $0x14] sm:$0xf]
          %v1851 = vld [vmem:[%s351 + $0x18] sm:$0xf]
          %v1852 = vld [vmem:[%s351 + $0x1c] sm:$0xf]
          %v1853 = vld [vmem:[%s351 + $0x20] sm:$0xf]
          %v1854 = vld [vmem:[%s351 + $0x24] sm:$0xf]
          %v1855 = vld [vmem:[%s351 + $0x28] sm:$0xf]
          %v1856 = vld [vmem:[%s351 + $0x2c] sm:$0xf]
          %v1857 = vld [vmem:[%s351 + $0x30] sm:$0xf]
          %v1858 = vld [vmem:[%s351 + $0x34] sm:$0xf]
          %v1859 = vld [vmem:[%s351 + $0x38] sm:$0xf]
          %v1860 = vld [vmem:[%s351 + $0x3c] sm:$0xf]
          %v1861 = vld [vmem:[%s351 + $0x40] sm:$0xf]
          %v1862 = vld [vmem:[%s351 + $0x44] sm:$0xf]
          %v1863 = vld [vmem:[%s351 + $0x48] sm:$0xf]
          %v1864 = vld [vmem:[%s351 + $0x4c] sm:$0xf]
          %v1865 = vld [vmem:[%s351 + $0x50] sm:$0xf]
          %v1866 = vld [vmem:[%s351 + $0x54] sm:$0xf]
          %v1867 = vld [vmem:[%s351 + $0x58] sm:$0xf]
          %v1868 = vld [vmem:[%s351 + $0x5c] sm:$0xf]
          %v1869 = vld [vmem:[%s351 + $0x60] sm:$0xf]
          %v1870 = vld [vmem:[%s351 + $0x64] sm:$0xf]
          %v1871 = vld [vmem:[%s351 + $0x68] sm:$0xf]
          %v1872 = vld [vmem:[%s351 + $0x6c] sm:$0xf]
          %v1873 = vld [vmem:[%s351 + $0x70] sm:$0xf]
          %v1874 = vld [vmem:[%s351 + $0x74] sm:$0xf]
          %v1875 = vld [vmem:[%s351 + $0x78] sm:$0xf]
          %v1876 = vld [vmem:[%s351 + $0x7c] sm:$0xf]
          %v1877 = vld [vmem:[%s351 + $0x80] sm:$0xf]
          %v1878 = vld [vmem:[%s351 + $0x84] sm:$0xf]
          %v1879 = vld [vmem:[%s351 + $0x88] sm:$0xf]
          %v1880 = vld [vmem:[%s351 + $0x8c] sm:$0xf]
          %v1881 = vld [vmem:[%s351 + $0x90] sm:$0xf]
          %v1882 = vld [vmem:[%s351 + $0x94] sm:$0xf]
          %v1883 = vld [vmem:[%s351 + $0x98] sm:$0xf]
          %v1884 = vld [vmem:[%s351 + $0x9c] sm:$0xf]
          %v1885 = vld [vmem:[%s351 + $0xa0] sm:$0xf]
          %v1886 = vld [vmem:[%s351 + $0xa4] sm:$0xf]
          %v1887 = vld [vmem:[%s351 + $0xa8] sm:$0xf]
          %v1888 = vld [vmem:[%s351 + $0xac] sm:$0xf]
          %v1889 = vld [vmem:[%s351 + $0xb0] sm:$0xf]
          %v1890 = vld [vmem:[%s351 + $0xb4] sm:$0xf]
          %v1891 = vld [vmem:[%s351 + $0xb8] sm:$0xf]
          %v1892 = vld [vmem:[%s351 + $0xbc] sm:$0xf]
          %v1893 = vld [vmem:[%s351 + $0xc0] sm:$0xf]
          %v1894 = vld [vmem:[%s351 + $0xc4] sm:$0xf]
          %v1895 = vld [vmem:[%s351 + $0xc8] sm:$0xf]
          %v1896 = vld [vmem:[%s351 + $0xcc] sm:$0xf]
          %v1897 = vld [vmem:[%s351 + $0xd0] sm:$0xf]
          %v1898 = vld [vmem:[%s351 + $0xd4] sm:$0xf]
          %v1899 = vld [vmem:[%s351 + $0xd8] sm:$0xf]
          %v1900 = vld [vmem:[%s351 + $0xdc] sm:$0xf]
          %v1901 = vld [vmem:[%s351 + $0xe0] sm:$0xf]
          %v1902 = vld [vmem:[%s351 + $0xe4] sm:$0xf]
          %v1903 = vld [vmem:[%s351 + $0xe8] sm:$0xf]
          %v1904 = vld [vmem:[%s351 + $0xec] sm:$0xf]
          %v1905 = vld [vmem:[%s351 + $0xf0] sm:$0xf]
          %v1906 = vld [vmem:[%s351 + $0xf4] sm:$0xf]
          %v1907 = vld [vmem:[%s351 + $0xf8] sm:$0xf]
          %v1908 = vld [vmem:[%s351 + $0xfc] sm:$0xf]
          %v1909 = vld [vmem:[%s351 + $0x100] sm:$0xf]
          %v1910 = vld [vmem:[%s351 + $0x104] sm:$0xf]
          %v1911 = vld [vmem:[%s351 + $0x108] sm:$0xf]
          %v1912 = vld [vmem:[%s351 + $0x10c] sm:$0xf]
          %v1913 = vld [vmem:[%s351 + $0x110] sm:$0xf]
          %v1914 = vld [vmem:[%s351 + $0x114] sm:$0xf]
          %v1915 = vld [vmem:[%s351 + $0x118] sm:$0xf]
          %v1916 = vld [vmem:[%s351 + $0x11c] sm:$0xf]
          %v1917 = vld [vmem:[%s351 + $0x120] sm:$0xf]
          %v1918 = vld [vmem:[%s351 + $0x124] sm:$0xf]
          %v1919 = vld [vmem:[%s351 + $0x128] sm:$0xf]
          %v1920 = vld [vmem:[%s351 + $0x12c] sm:$0xf]
          %v1921 = vld [vmem:[%s351 + $0x130] sm:$0xf]
          %v1922 = vld [vmem:[%s351 + $0x134] sm:$0xf]
          %v1923 = vld [vmem:[%s351 + $0x138] sm:$0xf]
          %v1924 = vld [vmem:[%s351 + $0x13c] sm:$0xf]
          %v1925 = vld [vmem:[%s351 + $0x140] sm:$0xf]
          %v1926 = vld [vmem:[%s351 + $0x144] sm:$0xf]
          %v1927 = vld [vmem:[%s351 + $0x148] sm:$0xf]
          %v1928 = vld [vmem:[%s351 + $0x14c] sm:$0xf]
          %v1929 = vld [vmem:[%s351 + $0x150] sm:$0xf]
          %v1930 = vld [vmem:[%s351 + $0x154] sm:$0xf]
          %v1931 = vld [vmem:[%s351 + $0x158] sm:$0xf]
          %v1932 = vld [vmem:[%s351 + $0x15c] sm:$0xf]
          %v1933 = vld [vmem:[%s351 + $0x160] sm:$0xf]
          %v1934 = vld [vmem:[%s351 + $0x164] sm:$0xf]
          %v1935 = vld [vmem:[%s351 + $0x168] sm:$0xf]
          %v1936 = vld [vmem:[%s351 + $0x16c] sm:$0xf]
          %v1937 = vld [vmem:[%s351 + $0x170] sm:$0xf]
          %v1938 = vld [vmem:[%s351 + $0x174] sm:$0xf]
          %v1939 = vld [vmem:[%s351 + $0x178] sm:$0xf]
          %v1940 = vld [vmem:[%s351 + $0x17c] sm:$0xf]
          %v1941 = vld [vmem:[%s351 + $0x180] sm:$0xf]
          %v1942 = vld [vmem:[%s351 + $0x184] sm:$0xf]
          %v1943 = vld [vmem:[%s351 + $0x188] sm:$0xf]
          %v1944 = vld [vmem:[%s351 + $0x18c] sm:$0xf]
          %v1945 = vld [vmem:[%s351 + $0x190] sm:$0xf]
          %v1946 = vld [vmem:[%s351 + $0x194] sm:$0xf]
          %v1947 = vld [vmem:[%s351 + $0x198] sm:$0xf]
          %v1948 = vld [vmem:[%s351 + $0x19c] sm:$0xf]
          %v1949 = vld [vmem:[%s351 + $0x1a0] sm:$0xf]
          %v1950 = vld [vmem:[%s351 + $0x1a4] sm:$0xf]
          %v1951 = vld [vmem:[%s351 + $0x1a8] sm:$0xf]
          %v1952 = vld [vmem:[%s351 + $0x1ac] sm:$0xf]
          %v1953 = vld [vmem:[%s351 + $0x1b0] sm:$0xf]
          %v1954 = vld [vmem:[%s351 + $0x1b4] sm:$0xf]
          %v1955 = vld [vmem:[%s351 + $0x1b8] sm:$0xf]
          %v1956 = vld [vmem:[%s351 + $0x1bc] sm:$0xf]
          %v1957 = vld [vmem:[%s351 + $0x1c0] sm:$0xf]
          %v1958 = vld [vmem:[%s351 + $0x1c4] sm:$0xf]
          %v1959 = vld [vmem:[%s351 + $0x1c8] sm:$0xf]
          %v1960 = vld [vmem:[%s351 + $0x1cc] sm:$0xf]
          %v1961 = vld [vmem:[%s351 + $0x1d0] sm:$0xf]
          %v1962 = vld [vmem:[%s351 + $0x1d4] sm:$0xf]
          %v1963 = vld [vmem:[%s351 + $0x1d8] sm:$0xf]
          %v1964 = vld [vmem:[%s351 + $0x1dc] sm:$0xf]
          %v1965 = vld [vmem:[%s351 + $0x1e0] sm:$0xf]
          %v1966 = vld [vmem:[%s351 + $0x1e4] sm:$0xf]
          %v1967 = vld [vmem:[%s351 + $0x1e8] sm:$0xf]
          %v1968 = vld [vmem:[%s351 + $0x1ec] sm:$0xf]
          %v1969 = vld [vmem:[%s351 + $0x1f0] sm:$0xf]
          %v1970 = vld [vmem:[%s351 + $0x1f4] sm:$0xf]
          %v1971 = vld [vmem:[%s351 + $0x1f8] sm:$0xf]
          %v1972 = vld [vmem:[%s351 + $0x1fc] sm:$0xf]
          %v2101 = vunpack.c.l.b16 %v1845
          %v2102 = vunpack.c.l.b16 %v1846
          %v2103 = vunpack.c.l.b16 %v1847
          %v2104 = vunpack.c.l.b16 %v1848
          %v2105 = vunpack.c.l.b16 %v1849
          %v2106 = vunpack.c.l.b16 %v1850
          %v2107 = vunpack.c.l.b16 %v1851
          %v2108 = vunpack.c.l.b16 %v1852
          %v2109 = vunpack.c.l.b16 %v1853
          %v2110 = vunpack.c.l.b16 %v1854
          %v2111 = vunpack.c.l.b16 %v1855
          %v2112 = vunpack.c.l.b16 %v1856
          %v2113 = vunpack.c.l.b16 %v1857
          %v2114 = vunpack.c.l.b16 %v1858
          %v2115 = vunpack.c.l.b16 %v1859
          %v2116 = vunpack.c.l.b16 %v1860
          %v2117 = vunpack.c.l.b16 %v1861
          %v2118 = vunpack.c.l.b16 %v1862
          %v2119 = vunpack.c.l.b16 %v1863
          %v2120 = vunpack.c.l.b16 %v1864
          %v2121 = vunpack.c.l.b16 %v1865
          %v2122 = vunpack.c.l.b16 %v1866
          %v2123 = vunpack.c.l.b16 %v1867
          %v2124 = vunpack.c.l.b16 %v1868
          %v2125 = vunpack.c.l.b16 %v1869
          %v2126 = vunpack.c.l.b16 %v1870
          %v2127 = vunpack.c.l.b16 %v1871
          %v2128 = vunpack.c.l.b16 %v1872
          %v2129 = vunpack.c.l.b16 %v1873
          %v2130 = vunpack.c.l.b16 %v1874
          %v2131 = vunpack.c.l.b16 %v1875
          %v2132 = vunpack.c.l.b16 %v1876
          %v2133 = vunpack.c.l.b16 %v1877
          %v2134 = vunpack.c.l.b16 %v1878
          %v2135 = vunpack.c.l.b16 %v1879
          %v2136 = vunpack.c.l.b16 %v1880
          %v2137 = vunpack.c.l.b16 %v1881
          %v2138 = vunpack.c.l.b16 %v1882
          %v2139 = vunpack.c.l.b16 %v1883
          %v2140 = vunpack.c.l.b16 %v1884
          %v2141 = vunpack.c.l.b16 %v1885
          %v2142 = vunpack.c.l.b16 %v1886
          %v2143 = vunpack.c.l.b16 %v1887
          %v2144 = vunpack.c.l.b16 %v1888
          %v2145 = vunpack.c.l.b16 %v1889
          %v2146 = vunpack.c.l.b16 %v1890
          %v2147 = vunpack.c.l.b16 %v1891
          %v2148 = vunpack.c.l.b16 %v1892
          %v2149 = vunpack.c.l.b16 %v1893
          %v2150 = vunpack.c.l.b16 %v1894
          %v2151 = vunpack.c.l.b16 %v1895
          %v2152 = vunpack.c.l.b16 %v1896
          %v2153 = vunpack.c.l.b16 %v1897
          %v2154 = vunpack.c.l.b16 %v1898
          %v2155 = vunpack.c.l.b16 %v1899
          %v2156 = vunpack.c.l.b16 %v1900
          %v2157 = vunpack.c.l.b16 %v1901
          %v2158 = vunpack.c.l.b16 %v1902
          %v2159 = vunpack.c.l.b16 %v1903
          %v2160 = vunpack.c.l.b16 %v1904
          %v2161 = vunpack.c.l.b16 %v1905
          %v2162 = vunpack.c.l.b16 %v1906
          %v2163 = vunpack.c.l.b16 %v1907
          %v2164 = vunpack.c.l.b16 %v1908
          %v2165 = vunpack.c.l.b16 %v1909
          %v2166 = vunpack.c.l.b16 %v1910
          %v2167 = vunpack.c.l.b16 %v1911
          %v2168 = vunpack.c.l.b16 %v1912
          %v2169 = vunpack.c.l.b16 %v1913
          %v2170 = vunpack.c.l.b16 %v1914
          %v2171 = vunpack.c.l.b16 %v1915
          %v2172 = vunpack.c.l.b16 %v1916
          %v2173 = vunpack.c.l.b16 %v1917
          %v2174 = vunpack.c.l.b16 %v1918
          %v2175 = vunpack.c.l.b16 %v1919
          %v2176 = vunpack.c.l.b16 %v1920
          %v2177 = vunpack.c.l.b16 %v1921
          %v2178 = vunpack.c.l.b16 %v1922
          %v2179 = vunpack.c.l.b16 %v1923
          %v2180 = vunpack.c.l.b16 %v1924
          %v2181 = vunpack.c.l.b16 %v1925
          %v2182 = vunpack.c.l.b16 %v1926
          %v2183 = vunpack.c.l.b16 %v1927
          %v2184 = vunpack.c.l.b16 %v1928
          %v2185 = vunpack.c.l.b16 %v1929
          %v2186 = vunpack.c.l.b16 %v1930
          %v2187 = vunpack.c.l.b16 %v1931
          %v2188 = vunpack.c.l.b16 %v1932
          %v2189 = vunpack.c.l.b16 %v1933
          %v2190 = vunpack.c.l.b16 %v1934
          %v2191 = vunpack.c.l.b16 %v1935
          %v2192 = vunpack.c.l.b16 %v1936
          %v2193 = vunpack.c.l.b16 %v1937
          %v2194 = vunpack.c.l.b16 %v1938
          %v2195 = vunpack.c.l.b16 %v1939
          %v2196 = vunpack.c.l.b16 %v1940
          %v2197 = vunpack.c.l.b16 %v1941
          %v2198 = vunpack.c.l.b16 %v1942
          %v2199 = vunpack.c.l.b16 %v1943
          %v2200 = vunpack.c.l.b16 %v1944
          %v2201 = vunpack.c.l.b16 %v1945
          %v2202 = vunpack.c.l.b16 %v1946
          %v2203 = vunpack.c.l.b16 %v1947
          %v2204 = vunpack.c.l.b16 %v1948
          %v2205 = vunpack.c.l.b16 %v1949
          %v2206 = vunpack.c.l.b16 %v1950
          %v2207 = vunpack.c.l.b16 %v1951
          %v2208 = vunpack.c.l.b16 %v1952
          %v2209 = vunpack.c.l.b16 %v1953
          %v2210 = vunpack.c.l.b16 %v1954
          %v2211 = vunpack.c.l.b16 %v1955
          %v2212 = vunpack.c.l.b16 %v1956
          %v2213 = vunpack.c.l.b16 %v1957
          %v2214 = vunpack.c.l.b16 %v1958
          %v2215 = vunpack.c.l.b16 %v1959
          %v2216 = vunpack.c.l.b16 %v1960
          %v2217 = vunpack.c.l.b16 %v1961
          %v2218 = vunpack.c.l.b16 %v1962
          %v2219 = vunpack.c.l.b16 %v1963
          %v2220 = vunpack.c.l.b16 %v1964
          %v2221 = vunpack.c.l.b16 %v1965
          %v2222 = vunpack.c.l.b16 %v1966
          %v2223 = vunpack.c.l.b16 %v1967
          %v2224 = vunpack.c.l.b16 %v1968
          %v2225 = vunpack.c.l.b16 %v1969
          %v2226 = vunpack.c.l.b16 %v1970
          %v2227 = vunpack.c.l.b16 %v1971
          %v2228 = vunpack.c.l.b16 %v1972
          %v2229 = vpack.c.b16 %v2102, %v2101
          %v2230 = vpack.c.b16 %v2104, %v2103
          %v2231 = vpack.c.b16 %v2106, %v2105
          %v2232 = vpack.c.b16 %v2108, %v2107
          %v2233 = vpack.c.b16 %v2110, %v2109
          %v2234 = vpack.c.b16 %v2112, %v2111
          %v2235 = vpack.c.b16 %v2114, %v2113
          %v2236 = vpack.c.b16 %v2116, %v2115
          %v2237 = vpack.c.b16 %v2118, %v2117
          %v2238 = vpack.c.b16 %v2120, %v2119
          %v2239 = vpack.c.b16 %v2122, %v2121
          %v2240 = vpack.c.b16 %v2124, %v2123
          %v2241 = vpack.c.b16 %v2126, %v2125
          %v2242 = vpack.c.b16 %v2128, %v2127
          %v2243 = vpack.c.b16 %v2130, %v2129
          %v2244 = vpack.c.b16 %v2132, %v2131
          %v2245 = vpack.c.b16 %v2134, %v2133
          %v2246 = vpack.c.b16 %v2136, %v2135
          %v2247 = vpack.c.b16 %v2138, %v2137
          %v2248 = vpack.c.b16 %v2140, %v2139
          %v2249 = vpack.c.b16 %v2142, %v2141
          %v2250 = vpack.c.b16 %v2144, %v2143
          %v2251 = vpack.c.b16 %v2146, %v2145
          %v2252 = vpack.c.b16 %v2148, %v2147
          %v2253 = vpack.c.b16 %v2150, %v2149
          %v2254 = vpack.c.b16 %v2152, %v2151
          %v2255 = vpack.c.b16 %v2154, %v2153
          %v2256 = vpack.c.b16 %v2156, %v2155
          %v2257 = vpack.c.b16 %v2158, %v2157
          %v2258 = vpack.c.b16 %v2160, %v2159
          %v2259 = vpack.c.b16 %v2162, %v2161
          %v2260 = vpack.c.b16 %v2164, %v2163
          %v2261 = vpack.c.b16 %v2166, %v2165
          %v2262 = vpack.c.b16 %v2168, %v2167
          %v2263 = vpack.c.b16 %v2170, %v2169
          %v2264 = vpack.c.b16 %v2172, %v2171
          %v2265 = vpack.c.b16 %v2174, %v2173
          %v2266 = vpack.c.b16 %v2176, %v2175
          %v2267 = vpack.c.b16 %v2178, %v2177
          %v2268 = vpack.c.b16 %v2180, %v2179
          %v2269 = vpack.c.b16 %v2182, %v2181
          %v2270 = vpack.c.b16 %v2184, %v2183
          %v2271 = vpack.c.b16 %v2186, %v2185
          %v2272 = vpack.c.b16 %v2188, %v2187
          %v2273 = vpack.c.b16 %v2190, %v2189
          %v2274 = vpack.c.b16 %v2192, %v2191
          %v2275 = vpack.c.b16 %v2194, %v2193
          %v2276 = vpack.c.b16 %v2196, %v2195
          %v2277 = vpack.c.b16 %v2198, %v2197
          %v2278 = vpack.c.b16 %v2200, %v2199
          %v2279 = vpack.c.b16 %v2202, %v2201
          %v2280 = vpack.c.b16 %v2204, %v2203
          %v2281 = vpack.c.b16 %v2206, %v2205
          %v2282 = vpack.c.b16 %v2208, %v2207
          %v2283 = vpack.c.b16 %v2210, %v2209
          %v2284 = vpack.c.b16 %v2212, %v2211
          %v2285 = vpack.c.b16 %v2214, %v2213
          %v2286 = vpack.c.b16 %v2216, %v2215
          %v2287 = vpack.c.b16 %v2218, %v2217
          %v2288 = vpack.c.b16 %v2220, %v2219
          %v2289 = vpack.c.b16 %v2222, %v2221
          %v2290 = vpack.c.b16 %v2224, %v2223
          %v2291 = vpack.c.b16 %v2226, %v2225
          %v2292 = vpack.c.b16 %v2228, %v2227
          %2357 = vmatprep.subr.bf16.mxu0 0
          %2358 = vmatpush1.bf16.msra.mxu0 %v2229
          %2359 = vmatprep.subr.bf16.mxu0 0
          %2360 = vmatpush1.bf16.msra.mxu0 %v2230
          %2361 = vmatprep.subr.bf16.mxu0 0
          %2362 = vmatpush1.bf16.msra.mxu0 %v2231
          %2363 = vmatprep.subr.bf16.mxu0 0
          %2364 = vmatpush1.bf16.msra.mxu0 %v2232
          %2365 = vmatprep.subr.bf16.mxu0 0
          %2366 = vmatpush1.bf16.msra.mxu0 %v2233
          %2367 = vmatprep.subr.bf16.mxu0 0
          %2368 = vmatpush1.bf16.msra.mxu0 %v2234
          %2369 = vmatprep.subr.bf16.mxu0 0
          %2370 = vmatpush1.bf16.msra.mxu0 %v2235
          %2371 = vmatprep.subr.bf16.mxu0 0
          %2372 = vmatpush1.bf16.msra.mxu0 %v2236
          %2373 = vmatprep.subr.bf16.mxu0 0
          %2374 = vmatpush1.bf16.msra.mxu0 %v2237
          %2375 = vmatprep.subr.bf16.mxu0 0
          %2376 = vmatpush1.bf16.msra.mxu0 %v2238
          %2377 = vmatprep.subr.bf16.mxu0 0
          %2378 = vmatpush1.bf16.msra.mxu0 %v2239
          %2379 = vmatprep.subr.bf16.mxu0 0
          %2380 = vmatpush1.bf16.msra.mxu0 %v2240
          %2381 = vmatprep.subr.bf16.mxu0 0
          %2382 = vmatpush1.bf16.msra.mxu0 %v2241
          %2383 = vmatprep.subr.bf16.mxu0 0
          %2384 = vmatpush1.bf16.msra.mxu0 %v2242
          %2385 = vmatprep.subr.bf16.mxu0 0
          %2386 = vmatpush1.bf16.msra.mxu0 %v2243
          %2387 = vmatprep.subr.bf16.mxu0 0
          %2388 = vmatpush1.bf16.msra.mxu0 %v2244
          %2389 = vmatprep.mubr.bf16.mxu0 %v1838
          %2390 = vmatmul.mubr.bf16.gmra.mrb[0].mxu0 %v1837
          %v2391 = vpop.f32.mrb[0].mxu0
          %v2392 = vadd.f32 0.0, %v2391
          %v2393 = vpop.f32.mrb[0].mxu0
          %v2394 = vpop.f32.mrb[0].mxu0
          %v2395 = vpop.f32.mrb[0].mxu0
          %2396 = vdwg.mxu0
          %2397 = vmatprep.subr.bf16.mxu0 0
          %2398 = vmatpush1.bf16.msra.mxu0 %v2245
          %2399 = vmatprep.subr.bf16.mxu0 0
          %2400 = vmatpush1.bf16.msra.mxu0 %v2246
          %2401 = vmatprep.subr.bf16.mxu0 0
          %2402 = vmatpush1.bf16.msra.mxu0 %v2247
          %2403 = vmatprep.subr.bf16.mxu0 0
          %2404 = vmatpush1.bf16.msra.mxu0 %v2248
          %2405 = vmatprep.subr.bf16.mxu0 0
          %2406 = vmatpush1.bf16.msra.mxu0 %v2249
          %2407 = vmatprep.subr.bf16.mxu0 0
          %2408 = vmatpush1.bf16.msra.mxu0 %v2250
          %2409 = vmatprep.subr.bf16.mxu0 0
          %2410 = vmatpush1.bf16.msra.mxu0 %v2251
          %2411 = vmatprep.subr.bf16.mxu0 0
          %2412 = vmatpush1.bf16.msra.mxu0 %v2252
          %2413 = vmatprep.subr.bf16.mxu0 0
          %2414 = vmatpush1.bf16.msra.mxu0 %v2253
          %2415 = vmatprep.subr.bf16.mxu0 0
          %2416 = vmatpush1.bf16.msra.mxu0 %v2254
          %2417 = vmatprep.subr.bf16.mxu0 0
          %2418 = vmatpush1.bf16.msra.mxu0 %v2255
          %2419 = vmatprep.subr.bf16.mxu0 0
          %2420 = vmatpush1.bf16.msra.mxu0 %v2256
          %2421 = vmatprep.subr.bf16.mxu0 0
          %2422 = vmatpush1.bf16.msra.mxu0 %v2257
          %2423 = vmatprep.subr.bf16.mxu0 0
          %2424 = vmatpush1.bf16.msra.mxu0 %v2258
          %2425 = vmatprep.subr.bf16.mxu0 0
          %2426 = vmatpush1.bf16.msra.mxu0 %v2259
          %2427 = vmatprep.subr.bf16.mxu0 0
          %2428 = vmatpush1.bf16.msra.mxu0 %v2260
          %2429 = vmatprep.mubr.bf16.mxu0 %v1840
          %2430 = vmatmul.mubr.bf16.gmra.mrb[0].mxu0 %v1839
          %v2431 = vpop.f32.mrb[0].mxu0
          %v2432 = vadd.f32 %v2392, %v2431
          %v2433 = vpop.f32.mrb[0].mxu0
          %v2434 = vpop.f32.mrb[0].mxu0
          %v2435 = vpop.f32.mrb[0].mxu0
          %2436 = vdwg.mxu0
          %2437 = vmatprep.subr.bf16.mxu0 0
          %2438 = vmatpush1.bf16.msra.mxu0 %v2261
          %2439 = vmatprep.subr.bf16.mxu0 0
          %2440 = vmatpush1.bf16.msra.mxu0 %v2262
          %2441 = vmatprep.subr.bf16.mxu0 0
          %2442 = vmatpush1.bf16.msra.mxu0 %v2263
          %2443 = vmatprep.subr.bf16.mxu0 0
          %2444 = vmatpush1.bf16.msra.mxu0 %v2264
          %2445 = vmatprep.subr.bf16.mxu0 0
          %2446 = vmatpush1.bf16.msra.mxu0 %v2265
          %2447 = vmatprep.subr.bf16.mxu0 0
          %2448 = vmatpush1.bf16.msra.mxu0 %v2266
          %2449 = vmatprep.subr.bf16.mxu0 0
          %2450 = vmatpush1.bf16.msra.mxu0 %v2267
          %2451 = vmatprep.subr.bf16.mxu0 0
          %2452 = vmatpush1.bf16.msra.mxu0 %v2268
          %2453 = vmatprep.subr.bf16.mxu0 0
          %2454 = vmatpush1.bf16.msra.mxu0 %v2269
          %2455 = vmatprep.subr.bf16.mxu0 0
          %2456 = vmatpush1.bf16.msra.mxu0 %v2270
          %2457 = vmatprep.subr.bf16.mxu0 0
          %2458 = vmatpush1.bf16.msra.mxu0 %v2271
          %2459 = vmatprep.subr.bf16.mxu0 0
          %2460 = vmatpush1.bf16.msra.mxu0 %v2272
          %2461 = vmatprep.subr.bf16.mxu0 0
          %2462 = vmatpush1.bf16.msra.mxu0 %v2273
          %2463 = vmatprep.subr.bf16.mxu0 0
          %2464 = vmatpush1.bf16.msra.mxu0 %v2274
          %2465 = vmatprep.subr.bf16.mxu0 0
          %2466 = vmatpush1.bf16.msra.mxu0 %v2275
          %2467 = vmatprep.subr.bf16.mxu0 0
          %2468 = vmatpush1.bf16.msra.mxu0 %v2276
          %2469 = vmatprep.mubr.bf16.mxu0 %v1842
          %2470 = vmatmul.mubr.bf16.gmra.mrb[0].mxu0 %v1841
          %v2471 = vpop.f32.mrb[0].mxu0
          %v2472 = vadd.f32 %v2432, %v2471
          %v2473 = vpop.f32.mrb[0].mxu0
          %v2474 = vpop.f32.mrb[0].mxu0
          %v2475 = vpop.f32.mrb[0].mxu0
          %2476 = vdwg.mxu0
          %2477 = vmatprep.subr.bf16.mxu0 0
          %2478 = vmatpush1.bf16.msra.mxu0 %v2277
          %2479 = vmatprep.subr.bf16.mxu0 0
          %2480 = vmatpush1.bf16.msra.mxu0 %v2278
          %2481 = vmatprep.subr.bf16.mxu0 0
          %2482 = vmatpush1.bf16.msra.mxu0 %v2279
          %2483 = vmatprep.subr.bf16.mxu0 0
          %2484 = vmatpush1.bf16.msra.mxu0 %v2280
          %2485 = vmatprep.subr.bf16.mxu0 0
          %2486 = vmatpush1.bf16.msra.mxu0 %v2281
          %2487 = vmatprep.subr.bf16.mxu0 0
          %2488 = vmatpush1.bf16.msra.mxu0 %v2282
          %2489 = vmatprep.subr.bf16.mxu0 0
          %2490 = vmatpush1.bf16.msra.mxu0 %v2283
          %2491 = vmatprep.subr.bf16.mxu0 0
          %2492 = vmatpush1.bf16.msra.mxu0 %v2284
          %2493 = vmatprep.subr.bf16.mxu0 0
          %2494 = vmatpush1.bf16.msra.mxu0 %v2285
          %2495 = vmatprep.subr.bf16.mxu0 0
          %2496 = vmatpush1.bf16.msra.mxu0 %v2286
          %2497 = vmatprep.subr.bf16.mxu0 0
          %2498 = vmatpush1.bf16.msra.mxu0 %v2287
          %2499 = vmatprep.subr.bf16.mxu0 0
          %2500 = vmatpush1.bf16.msra.mxu0 %v2288
          %2501 = vmatprep.subr.bf16.mxu0 0
          %2502 = vmatpush1.bf16.msra.mxu0 %v2289
          %2503 = vmatprep.subr.bf16.mxu0 0
          %2504 = vmatpush1.bf16.msra.mxu0 %v2290
          %2505 = vmatprep.subr.bf16.mxu0 0
          %2506 = vmatpush1.bf16.msra.mxu0 %v2291
          %2507 = vmatprep.subr.bf16.mxu0 0
          %2508 = vmatpush1.bf16.msra.mxu0 %v2292
          %2509 = vmatprep.mubr.bf16.mxu0 %v1844
          %2510 = vmatmul.mubr.bf16.gmra.mrb[0].mxu0 %v1843
          %v2511 = vpop.f32.mrb[0].mxu0
          %v2512 = vadd.f32 %v2472, %v2511
          %v2513 = vpop.f32.mrb[0].mxu0
          %v2514 = vpop.f32.mrb[0].mxu0
          %v2515 = vpop.f32.mrb[0].mxu0
          %2516 = vdwg.mxu0
          %v2517 = vld [vmem:[%s423] sm:$0x3]
          %v2518 = vrot.slane %v2512, 4
          %v2519 = vadd.f32 %v2512, %v2518
          %v2520 = vrot.slane %v2519, 2
          %v2521 = vadd.f32 %v2519, %v2520
          %v2522 = vrot.slane %v2521, 1
          %v2523 = vadd.f32 %v2521, %v2522
          %v2524 = vmul.f32 %v2523, %v1466
          %v2525 = vsub.f32 %v2512, %v2524
          %v2526 = vmul.f32 %v2525, %v2525
          %v2527 = vrot.slane %v2526, 4
          %v2528 = vadd.f32 %v2526, %v2527
          %v2529 = vrot.slane %v2528, 2
          %v2530 = vadd.f32 %v2528, %v2529
          %v2531 = vrot.slane %v2530, 1
          %v2532 = vadd.f32 %v2530, %v2531
          %v2533 = vmul.f32 %v2532, %v1466
          %v2534 = vadd.f32 %v2533, 1e-05
          %v2535 = vrsqrt.pop %v2534
          %v2536 = vmul.f32 %v2517, %v2535
          %v2537 = vmul.f32 %v2524, %v2536
          %v2539 = vrot.slane %v2537, 7
          %v2541 = vsub.f32 %v2517, %v2539
          %v2542 = vlaneseq
          %v2543 = vshrl.u32 %v2542, 7
          %v2544 = vsub.s32 0, %v2543
          %v2545 = vrot.slane %v2536, %v2544
          %v2546 = vmul.f32 %v2512, %v2545
          %v2547 = vlaneseq
          %v2548 = vshrl.u32 %v2547, 7
          %v2549 = vsub.s32 1, %v2548
          %v2550 = vrot.slane %v2541, %v2549
          %v2551 = vadd.f32 %v2546, %v2550
          %v2552 = vmax.f32 %v2551, 0.0
          %v2553 = vpack.c.bf16 %v2552, %v2552
          %v2554 = vld [vmem:[%s5] sm:$0xf]
          %v2555 = vld [vmem:[%s5 + $0x4] sm:$0xf]
          %v2556 = vld [vmem:[%s5 + $0x8] sm:$0xf]
          %v2557 = vld [vmem:[%s5 + $0xc] sm:$0xf]
          %v2558 = vld [vmem:[%s5 + $0x10] sm:$0xf]
          %v2559 = vld [vmem:[%s5 + $0x14] sm:$0xf]
          %v2560 = vld [vmem:[%s5 + $0x18] sm:$0xf]
          %v2561 = vld [vmem:[%s5 + $0x1c] sm:$0xf]
          %v2562 = vld [vmem:[%s5 + $0x20] sm:$0xf]
          %v2563 = vld [vmem:[%s5 + $0x24] sm:$0xf]
          %v2564 = vld [vmem:[%s5 + $0x28] sm:$0xf]
          %v2565 = vld [vmem:[%s5 + $0x2c] sm:$0xf]
          %v2566 = vld [vmem:[%s5 + $0x30] sm:$0xf]
          %v2567 = vld [vmem:[%s5 + $0x34] sm:$0xf]
          %v2568 = vld [vmem:[%s5 + $0x38] sm:$0xf]
          %v2569 = vld [vmem:[%s5 + $0x3c] sm:$0xf]
          %v2570 = vld [vmem:[%s6] sm:$0x1]
          %v2572 = vlaneseq
          %v2573 = vshrl.u32 %v2572, 7
          %v2574 = vsub.s32 0, %v2573
          %v2575 = vrot.slane %v2570, %v2574
          %v2593 = vunpack.c.l.b16 %v2554
          %v2594 = vunpack.c.l.b16 %v2555
          %v2595 = vunpack.c.l.b16 %v2556
          %v2596 = vunpack.c.l.b16 %v2557
          %v2597 = vunpack.c.l.b16 %v2558
          %v2598 = vunpack.c.l.b16 %v2559
          %v2599 = vunpack.c.l.b16 %v2560
          %v2600 = vunpack.c.l.b16 %v2561
          %v2601 = vunpack.c.l.b16 %v2562
          %v2602 = vunpack.c.l.b16 %v2563
          %v2603 = vunpack.c.l.b16 %v2564
          %v2604 = vunpack.c.l.b16 %v2565
          %v2605 = vunpack.c.l.b16 %v2566
          %v2606 = vunpack.c.l.b16 %v2567
          %v2607 = vunpack.c.l.b16 %v2568
          %v2608 = vunpack.c.l.b16 %v2569
          %v2609 = vpack.c.b16 %v2594, %v2593
          %v2610 = vpack.c.b16 %v2596, %v2595
          %v2611 = vpack.c.b16 %v2598, %v2597
          %v2612 = vpack.c.b16 %v2600, %v2599
          %v2613 = vpack.c.b16 %v2602, %v2601
          %v2614 = vpack.c.b16 %v2604, %v2603
          %v2615 = vpack.c.b16 %v2606, %v2605
          %v2616 = vpack.c.b16 %v2608, %v2607
          %2625 = vmatprep.subr.bf16.mxu0 0
          %2626 = vmatpush1.bf16.msra.mxu0 %v2609
          %2627 = vmatprep.subr.bf16.mxu0 0
          %2628 = vmatpush1.bf16.msra.mxu0 %v2610
          %2629 = vmatprep.subr.bf16.mxu0 0
          %2630 = vmatpush1.bf16.msra.mxu0 %v2611
          %2631 = vmatprep.subr.bf16.mxu0 0
          %2632 = vmatpush1.bf16.msra.mxu0 %v2612
          %2633 = vmatprep.subr.bf16.mxu0 0
          %2634 = vmatpush1.bf16.msra.mxu0 %v2613
          %2635 = vmatprep.subr.bf16.mxu0 0
          %2636 = vmatpush1.bf16.msra.mxu0 %v2614
          %2637 = vmatprep.subr.bf16.mxu0 0
          %2638 = vmatpush1.bf16.msra.mxu0 %v2615
          %2639 = vmatprep.subr.bf16.mxu0 0
          %2640 = vmatpush1.bf16.msra.mxu0 %v2616
          %2641 = vmatprep.subr.bf16.mxu0 0
          %2642 = vmatpush1.bf16.msra.mxu0 0
          %2643 = vmatprep.subr.bf16.mxu0 0
          %2644 = vmatpush1.bf16.msra.mxu0 0
          %2645 = vmatprep.subr.bf16.mxu0 0
          %2646 = vmatpush1.bf16.msra.mxu0 0
          %2647 = vmatprep.subr.bf16.mxu0 0
          %2648 = vmatpush1.bf16.msra.mxu0 0
          %2649 = vmatprep.subr.bf16.mxu0 0
          %2650 = vmatpush1.bf16.msra.mxu0 0
          %2651 = vmatprep.subr.bf16.mxu0 0
          %2652 = vmatpush1.bf16.msra.mxu0 0
          %2653 = vmatprep.subr.bf16.mxu0 0
          %2654 = vmatpush1.bf16.msra.mxu0 0
          %2655 = vmatprep.subr.bf16.mxu0 0
          %2656 = vmatpush1.bf16.msra.mxu0 0
          %2657 = vmatprep.mubr.bf16.mxu0 0
          %2658 = vmatmul.mubr.bf16.gmra.mrb[0].mxu0 %v2553
          %v2659 = vpop.f32.mrb[0].mxu0
          %v2660 = vadd.f32 %v2575, %v2659
          %v2661 = vpop.f32.mrb[0].mxu0
          %v2662 = vpop.f32.mrb[0].mxu0
          %v2663 = vpop.f32.mrb[0].mxu0
          %2664 = vdwg.mxu0
          %v2665 = vlaneseq
          %v2666 = vand.u32 %v2665, 127
          %vm2667 = vcmp.ge.s32.totalorder %v2666, 32
          %vm2668 = vcmp.lt.s32.totalorder %v2666, 42
          %vm2669 = vmand %vm2667, %vm2668
          %v2670 = vsel %vm2669, %v2660, -1e+30
          %2671 = vmax.xlane.f32.xlu0 %v2670
          %v2672 = vpop.xlane.xlu0 %2671
          %v2673 = vsub.f32 %v2670, %v2672
          %v2674 = vmul.f32 %v2673, 1.442695
          %v2675 = vpow.pop %v2674
          %2676 = vadd.xlane.f32.xlu0 %v2675
          %v2677 = vpop.xlane.xlu0 %2676
          %v2678 = vrcp.pop %v2677
          %v2679 = vmul.f32 %v2675, %v2678
          %vm2680 = vcmp.lt.s32.totalorder %v2666, 32
          %v2681 = vsel %vm2680, %v2660, %v2679
          %2682 = vst [vmem:[%s427] sm:$0xff] %v2681
        $region64: #{paired_smile_forward.1} parent=47 // pred_fallthru
          _
        %p2683 = scmp.lt.s32.totalorder %s28, 1
        %s2684 = scalar_select %p2683, %s28, 1
        %s2685 = smul.addr %s2684, 8
        %s2686 = scalar_lea.vmem %s7, %s2685
        // Predicated region
        $region65: #{paired_smile_forward.1} parent=47 // pred_check
          %p2687 = pneg %p230
        $region66: #{paired_smile_forward.1} parent=47 // pred_check_branch
          %2689 = sbr.rel (%p2687) target = $region68
        $region67: #{paired_smile_forward.1} parent=47 // pred_region
          _
        $region68: #{paired_smile_forward.1} parent=47 // pred_fallthru
          _
      $region48: #{paired_smile_forward.1} parent=5 // pred_fallthru
        _
      %p2690 = scmp.le.s32.totalorder 2, %s19
      // Predicated region
      $region69: #{paired_smile_forward.1} parent=5 // pred_check
        %p2691 = pneg %p2690
      $region70: #{paired_smile_forward.1} parent=5 // pred_check_branch
        %2693 = sbr.rel (%p2691) target = $region72
      $region71: #{paired_smile_forward.1} parent=5 // pred_region
        %s2694 = ssub.s32 %s19, 2
        // Predicated region
        $region73: #{paired_smile_forward.1} parent=71 // pred_check
          %p2695 = pneg %p236
        $region74: #{paired_smile_forward.1} parent=71 // pred_check_branch
          %2697 = sbr.rel (%p2695) target = $region76
        $region75: #{paired_smile_forward.1} parent=71 // pred_region
          %p2698 = scmp.lt.s32.totalorder %s30, 1
          %s2699 = scalar_select %p2698, %s30, 1
          %s2700 = smul.addr %s2699, 8
          %s2701 = scalar_lea.vmem %s7, %s2700
        $region76: #{paired_smile_forward.1} parent=71 // pred_fallthru
          _
      $region72: #{paired_smile_forward.1} parent=5 // pred_fallthru
        _
    $region6: #{paired_smile_forward.1} parent=1 // loop_footer
      %s23 = sadd.s32 1, %s19
    $region7: #{paired_smile_forward.1} parent=1 // loop_footer_branch
      %18 = sbr.rel target = $region3
    $region8: #{paired_smile_forward.1} parent=1 // loop_exit
      _
    %2702 = vsyncpa [#allocation4], 1
    %s2703 = scalar_lea.sflag [#allocation4], 1
    %2704 = vsyncpa %s2703, 1
    %2705 = vsyncpa [#allocation6], 1
    %s2706 = scalar_lea.sflag [#allocation6], 1
    %2707 = vsyncpa %s2706, 1

</llo_original>
